<compile_context>
chip_gen: v6e
topology: v6e:2x2x1
jax: 0.10.0
libtpu: 0.0.40
codegen_flags: <defaults>
</compile_context>

<pallas_src>
import numpy as np
import jax
import jax.numpy as jnp
from jax import lax
from jax.experimental import pallas as pl
from jax.experimental.pallas import tpu as pltpu


# ----------------------- model dimensions (fixed by the module) -------------
CIN, H, W = 3, 32, 32
C1, C2 = 6, 16
FC1, FC2 = 120, 10
# Stage layouts (rows = batch-major blocks, lanes = channel-major blocks):
#   x / conv1 : rows n*32 + y (y<=31), lanes ci*32 + w   (w<=31)
#   conv1 out : rows n*32 + y (y<=30), lanes co*32 + x   (x<=30)
#   pool1 out : rows n*16 + y (y<=14), lanes co*32 + 2*k (k<=14)   [stride-2 lanes]
#   conv2 out : rows n*16 + y (y<=13), lanes co*16 + x   (x<=13)
#   pool2 out : rows y*N  + n (y<=6),  lanes co*16 + 2*k (k<=6)
# Unused rows/lanes hold garbage that is never selected downstream.


def _shift(x, d, axis):
    """result[i] = x[i + d] along `axis`.  The wrapped tail only lands in
    padding rows/cols that are never selected downstream."""
    if d == 0:
        return x
    n = x.shape[axis]
    return lax.concatenate(
        [lax.slice_in_dim(x, d, n, axis=axis),
         lax.slice_in_dim(x, 0, d, axis=axis)],
        dimension=axis)


# ------------------------------- fused kernel -------------------------------
def _fused_kernel(x_ref, m1_ref, b1_ref, e1_ref,
                  m2_ref, b2_ref, e2_ref,
                  w1_ref, fb1_ref, w2_ref, fb2_ref, o_ref):
    f32 = jnp.float32
    n_batch = o_ref.shape[0]

    # ---- conv1: 4 taps, each a lane-dense matmul against a kron'd weight ----
    x = x_ref[...]                                       # (32N, 96)
    acc = None
    tap = 0
    for dy in range(2):
        for dx in range(2):
            t = _shift(_shift(x, dy, 0), dx, 1)
            c = jnp.dot(t, m1_ref[tap], preferred_element_type=f32)
            acc = c if acc is None else acc + c
            tap += 1
    a1 = acc + b1_ref[...]                               # (32N, 192)

    # ---- maxpool 2x2 + relu (batched over channel & batch) ----
    zr = jnp.maximum(a1, _shift(a1, 1, 0))               # adjacent-row max (VPU)
    rp = jnp.dot(e1_ref[...], zr, preferred_element_type=f32)   # stride-2 row select (MXU)
    mx = jnp.maximum(rp, _shift(rp, 1, 1))               # adjacent-col max (VPU)
    p1 = jnp.maximum(mx, 0.0)                            # (16N, 192); pooled at lanes co*32+2k

    # ---- conv2: 4 taps; pool1's column selection is folded into m2 ----
    acc = None
    tap = 0
    for dy in range(2):
        for dx in range(2):
            t = _shift(_shift(p1, dy, 0), 2 * dx, 1)
            c = jnp.dot(t, m2_ref[tap], preferred_element_type=f32)
            acc = c if acc is None else acc + c
            tap += 1
    a2 = acc + b2_ref[...]                               # (16N, 256)

    # ---- maxpool 2x2 + relu ----
    zr2 = jnp.maximum(a2, _shift(a2, 1, 0))
    rp2 = jnp.dot(e2_ref[...], zr2, preferred_element_type=f32)  # (7N, 256), rows y*N + n
    mx2 = jnp.maximum(rp2, _shift(rp2, 1, 1))
    p2 = jnp.maximum(mx2, 0.0)                           # pooled at lanes co*16+2k

    # ---- flatten folded into fc1: 128-aligned lane concat of the 7 y-rows ----
    pbig = jnp.concatenate(
        [p2[j * n_batch:(j + 1) * n_batch, :] for j in range(7)], axis=1)  # (N, 1792)
    h = jnp.dot(pbig, w1_ref[...], preferred_element_type=f32) + fb1_ref[...]
    h = jnp.maximum(h, 0.0)                              # (N, 120)
    y = jnp.dot(h, w2_ref[...], preferred_element_type=f32) + fb2_ref[...]
    o_ref[...] = jnp.maximum(y, 0.0)                     # (N, 10)


# ------------------------- host-side constant builders -----------------------
def _pool1_row_select(n):
    # (16n, 32n): picks rows s*32 + 2j -> output row s*16 + j, j in 0..14.
    blk = np.zeros((16, 32), np.float32)
    blk[np.arange(15), 2 * np.arange(15)] = 1.0
    return np.kron(np.eye(n, dtype=np.float32), blk)


def _pool2_row_select(n):
    # (7n, 16n): picks rows s*16 + 2j -> output row j*n + s (y-major, sample-minor).
    e = np.zeros((7 * n, 16 * n), np.float32)
    for j in range(7):
        for s in range(n):
            e[j * n + s, s * 16 + 2 * j] = 1.0
    return e


def _col_sel():
    # (32, 16): P[2x, x] = 1 for x in 0..13 — folds pool1's stride-2 column
    # selection into conv2's channel-mix matrices.
    p = np.zeros((32, 16), np.float32)
    p[2 * np.arange(14), np.arange(14)] = 1.0
    return p


# ------------------------------- host wrapper --------------------------------
@jax.jit
def simple_conv_forward(x_nchw, params):
    f32 = jnp.float32
    n = x_nchw.shape[0]

    # Input layout plumbing: (N,3,32,32) -> rows (n,y), lanes (ci,w).
    x2d = jnp.transpose(x_nchw.astype(f32), (0, 2, 1, 3)).reshape(n * H, CIN * W)

    w1 = params["conv1_w"].astype(f32)                   # (6,3,2,2)
    w2 = params["conv2_w"].astype(f32)                   # (16,6,2,2)
    eye32 = jnp.eye(32, dtype=f32)
    psel = jnp.asarray(_col_sel())
    # conv1 tap matrices: (96, 192) with [ci*32+w, co*32+w] = w1[co,ci,dy,dx]
    m1 = jnp.stack([jnp.kron(w1[:, :, dy, dx].T, eye32)
                    for dy in range(2) for dx in range(2)])
    # conv2 tap matrices (+ pool1 col select folded in): (192, 256) with
    # [ci*32 + 2x, co*16 + x] = w2[co,ci,dy,dx] for x in 0..13
    m2 = jnp.stack([jnp.kron(w2[:, :, dy, dx].T, psel)
                    for dy in range(2) for dx in range(2)])
    b1row = jnp.repeat(params["conv1_b"].astype(f32), 32).reshape(1, C1 * 32)
    b2row = jnp.repeat(params["conv2_b"].astype(f32), 16).reshape(1, C2 * 16)

    e1 = jnp.asarray(_pool1_row_select(n))               # (16n, 32n)
    e2 = jnp.asarray(_pool2_row_select(n))               # (7n, 16n)

    # fc1 weights reordered so the in-kernel flatten is a 256-aligned concat of
    # 7 per-y row blocks; pool2's stride-2 column selection is folded in as
    # zero rows at the odd / padding lane positions.
    w1r = params["fc1_w"].astype(f32).reshape(FC1, C2, 7, 7)      # (f, co, y, x)
    w1t = jnp.transpose(w1r, (2, 1, 3, 0))                        # (y, co, x, f)
    w1big = jnp.zeros((7, C2, 16, FC1), f32).at[:, :, 0:14:2, :].set(w1t)
    w1big = w1big.reshape(7 * C2 * 16, FC1)                       # (1792, 120)
    fb1 = params["fc1_b"].astype(f32).reshape(1, FC1)
    w2fc = params["fc2_w"].astype(f32).T                          # (120, 10)
    fb2 = params["fc2_b"].astype(f32).reshape(1, FC2)

    vmem = pl.BlockSpec(memory_space=pltpu.MemorySpace.VMEM)
    return pl.pallas_call(
        _fused_kernel,
        out_shape=jax.ShapeDtypeStruct((n, FC2), f32),
        in_specs=[vmem] * 11,
        out_specs=vmem,
    )(x2d, m1, b1row, e1, m2, b2row, e2, w1big, fb1, w2fc, fb2)


# ------------------------------ pure-JAX reference ---------------------------
def reference_forward(x_nchw, p):
    dn = ("NCHW", "OIHW", "NCHW")
    y = jax.lax.conv_general_dilated(x_nchw, p["conv1_w"], (1, 1), "VALID",
                                     dimension_numbers=dn)
    y = jnp.maximum(y + p["conv1_b"][None, :, None, None], 0.0)
    y = jax.lax.reduce_window(y, -jnp.inf, jax.lax.max, (1, 1, 2, 2),
                              (1, 1, 2, 2), "VALID")
    y = jax.lax.conv_general_dilated(y, p["conv2_w"], (1, 1), "VALID",
                                     dimension_numbers=dn)
    y = jnp.maximum(y + p["conv2_b"][None, :, None, None], 0.0)
    y = jax.lax.reduce_window(y, -jnp.inf, jax.lax.max, (1, 1, 2, 2),
                              (1, 1, 2, 2), "VALID")
    y = y.reshape(y.shape[0], -1)
    y = jnp.maximum(y @ p["fc1_w"].T + p["fc1_b"], 0.0)
    y = jnp.maximum(y @ p["fc2_w"].T + p["fc2_b"], 0.0)
    return y


# ----------------------------------- main -------------------------------------
if __name__ == "__main__":
    key = jax.random.PRNGKey(0)
    ks = jax.random.split(key, 9)

    # PyTorch-style NCHW input; 32x32 spatial is what fc1 = Linear(16*7*7) implies.
    x = jax.random.normal(ks[0], (2, 3, 32, 32), jnp.float32)

    params = {
        "conv1_w": jax.random.normal(ks[1], (6, 3, 2, 2), jnp.float32) * 0.2,
        "conv1_b": jax.random.normal(ks[2], (6,), jnp.float32) * 0.1,
        "conv2_w": jax.random.normal(ks[3], (16, 6, 2, 2), jnp.float32) * 0.1,
        "conv2_b": jax.random.normal(ks[4], (16,), jnp.float32) * 0.1,
        "fc1_w":   jax.random.normal(ks[5], (120, 16 * 7 * 7), jnp.float32) * 0.02,
        "fc1_b":   jax.random.normal(ks[6], (120,), jnp.float32) * 0.1,
        "fc2_w":   jax.random.normal(ks[7], (10, 120), jnp.float32) * 0.05,
        "fc2_b":   jax.random.normal(ks[8], (10,), jnp.float32) * 0.1,
    }

    out = jax.block_until_ready(simple_conv_forward(x, params))
    assert out.shape == (2, 10), out.shape

    ref = jax.block_until_ready(reference_forward(x, params))
    np.testing.assert_allclose(np.asarray(out), np.asarray(ref),
                               rtol=1e-3, atol=1e-3)

    print("KERNEL_OK")
</pallas_src>

<mosaic_0001>
module attributes {stable_mosaic.version = 11 : i64} {
  func.func @_fused_kernel(%arg0: memref<64x96xf32, #tpu.memory_space<vmem>>, %arg1: memref<4x96x192xf32, #tpu.memory_space<vmem>>, %arg2: memref<1x192xf32, #tpu.memory_space<vmem>>, %arg3: memref<32x64xf32, #tpu.memory_space<vmem>>, %arg4: memref<4x192x256xf32, #tpu.memory_space<vmem>>, %arg5: memref<1x256xf32, #tpu.memory_space<vmem>>, %arg6: memref<14x32xf32, #tpu.memory_space<vmem>>, %arg7: memref<1792x120xf32, #tpu.memory_space<vmem>>, %arg8: memref<1x120xf32, #tpu.memory_space<vmem>>, %arg9: memref<120x10xf32, #tpu.memory_space<vmem>>, %arg10: memref<1x10xf32, #tpu.memory_space<vmem>>, %arg11: memref<2x10xf32, #tpu.memory_space<vmem>>) attributes {dimension_semantics = [], scalar_prefetch = 0 : i64, scratch_operands = 0 : i64, tpu.core_type = #tpu.core_type<tc>} {
    %c0 = arith.constant 0 : index
    %c0_0 = arith.constant 0 : index
    %0 = vector.load %arg0[%c0, %c0_0] : memref<64x96xf32, #tpu.memory_space<vmem>>, vector<64x96xf32>
    %c0_1 = arith.constant 0 : index
    %c0_2 = arith.constant 0 : index
    %c0_3 = arith.constant 0 : index
    %1 = vector.load %arg1[%c0_1, %c0_2, %c0_3] : memref<4x96x192xf32, #tpu.memory_space<vmem>>, vector<1x96x192xf32>
    %2 = vector.shape_cast %1 : vector<1x96x192xf32> to vector<96x192xf32>
    %cst = arith.constant dense<0.000000e+00> : vector<64x192xf32>
    %3 = tpu.matmul %0, %2, %cst {dimension_numbers = #tpu.dot_dimension_numbers<[1], [0], [0], [1], [0, 0, 1, 1], [], []>} : vector<64x96xf32>, vector<96x192xf32>, vector<64x192xf32> -> vector<64x192xf32>
    %4 = vector.extract_strided_slice %0 {offsets = [0, 1], sizes = [64, 95], strides = [1, 1]} : vector<64x96xf32> to vector<64x95xf32>
    %5 = vector.extract_strided_slice %0 {offsets = [0, 0], sizes = [64, 1], strides = [1, 1]} : vector<64x96xf32> to vector<64x1xf32>
    %6 = tpu.concatenate %4, %5 in 1 : vector<64x95xf32>, vector<64x1xf32> -> vector<64x96xf32>
    %c1 = arith.constant 1 : index
    %c0_4 = arith.constant 0 : index
    %c0_5 = arith.constant 0 : index
    %7 = vector.load %arg1[%c1, %c0_4, %c0_5] : memref<4x96x192xf32, #tpu.memory_space<vmem>>, vector<1x96x192xf32>
    %8 = vector.shape_cast %7 : vector<1x96x192xf32> to vector<96x192xf32>
    %cst_6 = arith.constant dense<0.000000e+00> : vector<64x192xf32>
    %9 = tpu.matmul %6, %8, %cst_6 {dimension_numbers = #tpu.dot_dimension_numbers<[1], [0], [0], [1], [0, 0, 1, 1], [], []>} : vector<64x96xf32>, vector<96x192xf32>, vector<64x192xf32> -> vector<64x192xf32>
    %10 = arith.addf %3, %9 : vector<64x192xf32>
    %11 = vector.extract_strided_slice %0 {offsets = [1, 0], sizes = [63, 96], strides = [1, 1]} : vector<64x96xf32> to vector<63x96xf32>
    %12 = vector.extract_strided_slice %0 {offsets = [0, 0], sizes = [1, 96], strides = [1, 1]} : vector<64x96xf32> to vector<1x96xf32>
    %13 = tpu.concatenate %11, %12 in 0 : vector<63x96xf32>, vector<1x96xf32> -> vector<64x96xf32>
    %c2 = arith.constant 2 : index
    %c0_7 = arith.constant 0 : index
    %c0_8 = arith.constant 0 : index
    %14 = vector.load %arg1[%c2, %c0_7, %c0_8] : memref<4x96x192xf32, #tpu.memory_space<vmem>>, vector<1x96x192xf32>
    %15 = vector.shape_cast %14 : vector<1x96x192xf32> to vector<96x192xf32>
    %cst_9 = arith.constant dense<0.000000e+00> : vector<64x192xf32>
    %16 = tpu.matmul %13, %15, %cst_9 {dimension_numbers = #tpu.dot_dimension_numbers<[1], [0], [0], [1], [0, 0, 1, 1], [], []>} : vector<64x96xf32>, vector<96x192xf32>, vector<64x192xf32> -> vector<64x192xf32>
    %17 = arith.addf %10, %16 : vector<64x192xf32>
    %18 = vector.extract_strided_slice %0 {offsets = [1, 0], sizes = [63, 96], strides = [1, 1]} : vector<64x96xf32> to vector<63x96xf32>
    %19 = vector.extract_strided_slice %0 {offsets = [0, 0], sizes = [1, 96], strides = [1, 1]} : vector<64x96xf32> to vector<1x96xf32>
    %20 = tpu.concatenate %18, %19 in 0 : vector<63x96xf32>, vector<1x96xf32> -> vector<64x96xf32>
    %21 = vector.extract_strided_slice %20 {offsets = [0, 1], sizes = [64, 95], strides = [1, 1]} : vector<64x96xf32> to vector<64x95xf32>
    %22 = vector.extract_strided_slice %20 {offsets = [0, 0], sizes = [64, 1], strides = [1, 1]} : vector<64x96xf32> to vector<64x1xf32>
    %23 = tpu.concatenate %21, %22 in 1 : vector<64x95xf32>, vector<64x1xf32> -> vector<64x96xf32>
    %c3 = arith.constant 3 : index
    %c0_10 = arith.constant 0 : index
    %c0_11 = arith.constant 0 : index
    %24 = vector.load %arg1[%c3, %c0_10, %c0_11] : memref<4x96x192xf32, #tpu.memory_space<vmem>>, vector<1x96x192xf32>
    %25 = vector.shape_cast %24 : vector<1x96x192xf32> to vector<96x192xf32>
    %cst_12 = arith.constant dense<0.000000e+00> : vector<64x192xf32>
    %26 = tpu.matmul %23, %25, %cst_12 {dimension_numbers = #tpu.dot_dimension_numbers<[1], [0], [0], [1], [0, 0, 1, 1], [], []>} : vector<64x96xf32>, vector<96x192xf32>, vector<64x192xf32> -> vector<64x192xf32>
    %27 = arith.addf %17, %26 : vector<64x192xf32>
    %c0_13 = arith.constant 0 : index
    %c0_14 = arith.constant 0 : index
    %28 = vector.load %arg2[%c0_13, %c0_14] : memref<1x192xf32, #tpu.memory_space<vmem>>, vector<1x192xf32>
    %29 = vector.broadcast %28 : vector<1x192xf32> to vector<64x192xf32>
    %30 = arith.addf %27, %29 : vector<64x192xf32>
    %31 = vector.extract_strided_slice %30 {offsets = [1, 0], sizes = [63, 192], strides = [1, 1]} : vector<64x192xf32> to vector<63x192xf32>
    %32 = vector.extract_strided_slice %30 {offsets = [0, 0], sizes = [1, 192], strides = [1, 1]} : vector<64x192xf32> to vector<1x192xf32>
    %33 = tpu.concatenate %31, %32 in 0 : vector<63x192xf32>, vector<1x192xf32> -> vector<64x192xf32>
    %34 = arith.maximumf %30, %33 : vector<64x192xf32>
    %c0_15 = arith.constant 0 : index
    %c0_16 = arith.constant 0 : index
    %35 = vector.load %arg3[%c0_15, %c0_16] : memref<32x64xf32, #tpu.memory_space<vmem>>, vector<32x64xf32>
    %cst_17 = arith.constant dense<0.000000e+00> : vector<32x192xf32>
    %36 = tpu.matmul %35, %34, %cst_17 {dimension_numbers = #tpu.dot_dimension_numbers<[1], [0], [0], [1], [0, 0, 1, 1], [], []>} : vector<32x64xf32>, vector<64x192xf32>, vector<32x192xf32> -> vector<32x192xf32>
    %37 = vector.extract_strided_slice %36 {offsets = [0, 1], sizes = [32, 191], strides = [1, 1]} : vector<32x192xf32> to vector<32x191xf32>
    %38 = vector.extract_strided_slice %36 {offsets = [0, 0], sizes = [32, 1], strides = [1, 1]} : vector<32x192xf32> to vector<32x1xf32>
    %39 = tpu.concatenate %37, %38 in 1 : vector<32x191xf32>, vector<32x1xf32> -> vector<32x192xf32>
    %40 = arith.maximumf %36, %39 : vector<32x192xf32>
    %cst_18 = arith.constant 0.000000e+00 : f32
    %41 = vector.broadcast %cst_18 : f32 to vector<32x192xf32>
    %42 = arith.maximumf %40, %41 : vector<32x192xf32>
    %c0_19 = arith.constant 0 : index
    %c0_20 = arith.constant 0 : index
    %c0_21 = arith.constant 0 : index
    %43 = vector.load %arg4[%c0_19, %c0_20, %c0_21] : memref<4x192x256xf32, #tpu.memory_space<vmem>>, vector<1x192x256xf32>
    %44 = vector.shape_cast %43 : vector<1x192x256xf32> to vector<192x256xf32>
    %cst_22 = arith.constant dense<0.000000e+00> : vector<32x256xf32>
    %45 = tpu.matmul %42, %44, %cst_22 {dimension_numbers = #tpu.dot_dimension_numbers<[1], [0], [0], [1], [0, 0, 1, 1], [], []>} : vector<32x192xf32>, vector<192x256xf32>, vector<32x256xf32> -> vector<32x256xf32>
    %46 = vector.extract_strided_slice %42 {offsets = [0, 2], sizes = [32, 190], strides = [1, 1]} : vector<32x192xf32> to vector<32x190xf32>
    %47 = vector.extract_strided_slice %42 {offsets = [0, 0], sizes = [32, 2], strides = [1, 1]} : vector<32x192xf32> to vector<32x2xf32>
    %48 = tpu.concatenate %46, %47 in 1 : vector<32x190xf32>, vector<32x2xf32> -> vector<32x192xf32>
    %c1_23 = arith.constant 1 : index
    %c0_24 = arith.constant 0 : index
    %c0_25 = arith.constant 0 : index
    %49 = vector.load %arg4[%c1_23, %c0_24, %c0_25] : memref<4x192x256xf32, #tpu.memory_space<vmem>>, vector<1x192x256xf32>
    %50 = vector.shape_cast %49 : vector<1x192x256xf32> to vector<192x256xf32>
    %cst_26 = arith.constant dense<0.000000e+00> : vector<32x256xf32>
    %51 = tpu.matmul %48, %50, %cst_26 {dimension_numbers = #tpu.dot_dimension_numbers<[1], [0], [0], [1], [0, 0, 1, 1], [], []>} : vector<32x192xf32>, vector<192x256xf32>, vector<32x256xf32> -> vector<32x256xf32>
    %52 = arith.addf %45, %51 : vector<32x256xf32>
    %53 = vector.extract_strided_slice %42 {offsets = [1, 0], sizes = [31, 192], strides = [1, 1]} : vector<32x192xf32> to vector<31x192xf32>
    %54 = vector.extract_strided_slice %42 {offsets = [0, 0], sizes = [1, 192], strides = [1, 1]} : vector<32x192xf32> to vector<1x192xf32>
    %55 = tpu.concatenate %53, %54 in 0 : vector<31x192xf32>, vector<1x192xf32> -> vector<32x192xf32>
    %c2_27 = arith.constant 2 : index
    %c0_28 = arith.constant 0 : index
    %c0_29 = arith.constant 0 : index
    %56 = vector.load %arg4[%c2_27, %c0_28, %c0_29] : memref<4x192x256xf32, #tpu.memory_space<vmem>>, vector<1x192x256xf32>
    %57 = vector.shape_cast %56 : vector<1x192x256xf32> to vector<192x256xf32>
    %cst_30 = arith.constant dense<0.000000e+00> : vector<32x256xf32>
    %58 = tpu.matmul %55, %57, %cst_30 {dimension_numbers = #tpu.dot_dimension_numbers<[1], [0], [0], [1], [0, 0, 1, 1], [], []>} : vector<32x192xf32>, vector<192x256xf32>, vector<32x256xf32> -> vector<32x256xf32>
    %59 = arith.addf %52, %58 : vector<32x256xf32>
    %60 = vector.extract_strided_slice %42 {offsets = [1, 0], sizes = [31, 192], strides = [1, 1]} : vector<32x192xf32> to vector<31x192xf32>
    %61 = vector.extract_strided_slice %42 {offsets = [0, 0], sizes = [1, 192], strides = [1, 1]} : vector<32x192xf32> to vector<1x192xf32>
    %62 = tpu.concatenate %60, %61 in 0 : vector<31x192xf32>, vector<1x192xf32> -> vector<32x192xf32>
    %63 = vector.extract_strided_slice %62 {offsets = [0, 2], sizes = [32, 190], strides = [1, 1]} : vector<32x192xf32> to vector<32x190xf32>
    %64 = vector.extract_strided_slice %62 {offsets = [0, 0], sizes = [32, 2], strides = [1, 1]} : vector<32x192xf32> to vector<32x2xf32>
    %65 = tpu.concatenate %63, %64 in 1 : vector<32x190xf32>, vector<32x2xf32> -> vector<32x192xf32>
    %c3_31 = arith.constant 3 : index
    %c0_32 = arith.constant 0 : index
    %c0_33 = arith.constant 0 : index
    %66 = vector.load %arg4[%c3_31, %c0_32, %c0_33] : memref<4x192x256xf32, #tpu.memory_space<vmem>>, vector<1x192x256xf32>
    %67 = vector.shape_cast %66 : vector<1x192x256xf32> to vector<192x256xf32>
    %cst_34 = arith.constant dense<0.000000e+00> : vector<32x256xf32>
    %68 = tpu.matmul %65, %67, %cst_34 {dimension_numbers = #tpu.dot_dimension_numbers<[1], [0], [0], [1], [0, 0, 1, 1], [], []>} : vector<32x192xf32>, vector<192x256xf32>, vector<32x256xf32> -> vector<32x256xf32>
    %69 = arith.addf %59, %68 : vector<32x256xf32>
    %c0_35 = arith.constant 0 : index
    %c0_36 = arith.constant 0 : index
    %70 = vector.load %arg5[%c0_35, %c0_36] : memref<1x256xf32, #tpu.memory_space<vmem>>, vector<1x256xf32>
    %71 = vector.broadcast %70 : vector<1x256xf32> to vector<32x256xf32>
    %72 = arith.addf %69, %71 : vector<32x256xf32>
    %73 = vector.extract_strided_slice %72 {offsets = [1, 0], sizes = [31, 256], strides = [1, 1]} : vector<32x256xf32> to vector<31x256xf32>
    %74 = vector.extract_strided_slice %72 {offsets = [0, 0], sizes = [1, 256], strides = [1, 1]} : vector<32x256xf32> to vector<1x256xf32>
    %75 = tpu.concatenate %73, %74 in 0 : vector<31x256xf32>, vector<1x256xf32> -> vector<32x256xf32>
    %76 = arith.maximumf %72, %75 : vector<32x256xf32>
    %c0_37 = arith.constant 0 : index
    %c0_38 = arith.constant 0 : index
    %77 = vector.load %arg6[%c0_37, %c0_38] : memref<14x32xf32, #tpu.memory_space<vmem>>, vector<14x32xf32>
    %cst_39 = arith.constant dense<0.000000e+00> : vector<14x256xf32>
    %78 = tpu.matmul %77, %76, %cst_39 {dimension_numbers = #tpu.dot_dimension_numbers<[1], [0], [0], [1], [0, 0, 1, 1], [], []>} : vector<14x32xf32>, vector<32x256xf32>, vector<14x256xf32> -> vector<14x256xf32>
    %79 = vector.extract_strided_slice %78 {offsets = [0, 1], sizes = [14, 255], strides = [1, 1]} : vector<14x256xf32> to vector<14x255xf32>
    %80 = vector.extract_strided_slice %78 {offsets = [0, 0], sizes = [14, 1], strides = [1, 1]} : vector<14x256xf32> to vector<14x1xf32>
    %81 = tpu.concatenate %79, %80 in 1 : vector<14x255xf32>, vector<14x1xf32> -> vector<14x256xf32>
    %82 = arith.maximumf %78, %81 : vector<14x256xf32>
    %cst_40 = arith.constant 0.000000e+00 : f32
    %83 = vector.broadcast %cst_40 : f32 to vector<14x256xf32>
    %84 = arith.maximumf %82, %83 : vector<14x256xf32>
    %85 = vector.extract_strided_slice %84 {offsets = [0, 0], sizes = [2, 256], strides = [1, 1]} : vector<14x256xf32> to vector<2x256xf32>
    %86 = vector.extract_strided_slice %84 {offsets = [2, 0], sizes = [2, 256], strides = [1, 1]} : vector<14x256xf32> to vector<2x256xf32>
    %87 = vector.extract_strided_slice %84 {offsets = [4, 0], sizes = [2, 256], strides = [1, 1]} : vector<14x256xf32> to vector<2x256xf32>
    %88 = vector.extract_strided_slice %84 {offsets = [6, 0], sizes = [2, 256], strides = [1, 1]} : vector<14x256xf32> to vector<2x256xf32>
    %89 = vector.extract_strided_slice %84 {offsets = [8, 0], sizes = [2, 256], strides = [1, 1]} : vector<14x256xf32> to vector<2x256xf32>
    %90 = vector.extract_strided_slice %84 {offsets = [10, 0], sizes = [2, 256], strides = [1, 1]} : vector<14x256xf32> to vector<2x256xf32>
    %91 = vector.extract_strided_slice %84 {offsets = [12, 0], sizes = [2, 256], strides = [1, 1]} : vector<14x256xf32> to vector<2x256xf32>
    %92 = tpu.concatenate %85, %86, %87, %88, %89, %90, %91 in 1 : vector<2x256xf32>, vector<2x256xf32>, vector<2x256xf32>, vector<2x256xf32>, vector<2x256xf32>, vector<2x256xf32>, vector<2x256xf32> -> vector<2x1792xf32>
    %c0_41 = arith.constant 0 : index
    %c0_42 = arith.constant 0 : index
    %93 = vector.load %arg7[%c0_41, %c0_42] : memref<1792x120xf32, #tpu.memory_space<vmem>>, vector<1792x120xf32>
    %cst_43 = arith.constant dense<0.000000e+00> : vector<2x120xf32>
    %94 = tpu.matmul %92, %93, %cst_43 {dimension_numbers = #tpu.dot_dimension_numbers<[1], [0], [0], [1], [0, 0, 1, 1], [], []>} : vector<2x1792xf32>, vector<1792x120xf32>, vector<2x120xf32> -> vector<2x120xf32>
    %c0_44 = arith.constant 0 : index
    %c0_45 = arith.constant 0 : index
    %95 = vector.load %arg8[%c0_44, %c0_45] : memref<1x120xf32, #tpu.memory_space<vmem>>, vector<1x120xf32>
    %96 = vector.broadcast %95 : vector<1x120xf32> to vector<2x120xf32>
    %97 = arith.addf %94, %96 : vector<2x120xf32>
    %cst_46 = arith.constant 0.000000e+00 : f32
    %98 = vector.broadcast %cst_46 : f32 to vector<2x120xf32>
    %99 = arith.maximumf %97, %98 : vector<2x120xf32>
    %c0_47 = arith.constant 0 : index
    %c0_48 = arith.constant 0 : index
    %100 = vector.load %arg9[%c0_47, %c0_48] : memref<120x10xf32, #tpu.memory_space<vmem>>, vector<120x10xf32>
    %cst_49 = arith.constant dense<0.000000e+00> : vector<2x10xf32>
    %101 = tpu.matmul %99, %100, %cst_49 {dimension_numbers = #tpu.dot_dimension_numbers<[1], [0], [0], [1], [0, 0, 1, 1], [], []>} : vector<2x120xf32>, vector<120x10xf32>, vector<2x10xf32> -> vector<2x10xf32>
    %c0_50 = arith.constant 0 : index
    %c0_51 = arith.constant 0 : index
    %102 = vector.load %arg10[%c0_50, %c0_51] : memref<1x10xf32, #tpu.memory_space<vmem>>, vector<1x10xf32>
    %103 = vector.broadcast %102 : vector<1x10xf32> to vector<2x10xf32>
    %104 = arith.addf %101, %103 : vector<2x10xf32>
    %cst_52 = arith.constant 0.000000e+00 : f32
    %105 = vector.broadcast %cst_52 : f32 to vector<2x10xf32>
    %106 = arith.maximumf %104, %105 : vector<2x10xf32>
    %c0_53 = arith.constant 0 : index
    %c0_54 = arith.constant 0 : index
    %107 = vector.load %arg11[%c0_53, %c0_54] : memref<2x10xf32, #tpu.memory_space<vmem>>, vector<2x10xf32>
    tpu.vector_store %arg11[%c0_53, %c0_54], %106 {strides = array<i32>} : memref<2x10xf32, #tpu.memory_space<vmem>>, vector<2x10xf32>,
    return
  }
}

</mosaic_0001>

<llo_original>
// kernel: simple_conv_forward.1
$region0: #{simple_conv_forward.1}
  #allocation0 [shape = 'u32[]', space=smem, size = 0x4, offset = 0x4, fixed_abs, tag = 'smem constant byte address 0x4 - core index']
  #allocation1 [shape = 'u32[144,128]{1,0:T(1,128)}', space=vmem, size = 0x12000, scoped, tag = 'internal scratch']
  %s0 = inlined_call_operand.vmem [shape: f32[64,96], index: 0, kind: input, shape index: {}]
  %s1 = inlined_call_operand.vmem [shape: f32[4,96,192], index: 1, kind: input, shape index: {}]
  %s2 = inlined_call_operand.vmem [shape: f32[1,192], index: 2, kind: input, shape index: {}]
  %s3 = inlined_call_operand.vmem [shape: f32[32,64], index: 3, kind: input, shape index: {}]
  %s4 = inlined_call_operand.vmem [shape: f32[4,192,256], index: 4, kind: input, shape index: {}]
  %s5 = inlined_call_operand.vmem [shape: f32[1,256], index: 5, kind: input, shape index: {}]
  %s6 = inlined_call_operand.vmem [shape: f32[14,32], index: 6, kind: input, shape index: {}]
  %s7 = inlined_call_operand.vmem [shape: f32[1792,120], index: 7, kind: input, shape index: {}]
  %s8 = inlined_call_operand.vmem [shape: f32[1,120], index: 8, kind: input, shape index: {}]
  %s9 = inlined_call_operand.vmem [shape: f32[120,10], index: 9, kind: input, shape index: {}]
  %s10 = inlined_call_operand.vmem [shape: f32[1,10], index: 10, kind: input, shape index: {}]
  %s11 = inlined_call_operand.hbm [shape: f32[2,10], index: 11, kind: output, shape index: {}]
  %s12 = sld [smem:[#allocation0]]
  $region54: #{simple_conv_forward.1} parent=0
    _
  %s14 = ssub.s32 1, %s12
  %s15 = scalar_select 0, %s14, %s12
  $region1: #{simple_conv_forward.1} parent=0
    #allocation2 [shape = 'u8[1024]{0}', space=vmem, size = 0x400, scoped, tag = 'output window, operand 0, single buffered']
    #allocation3 [shape = 's32[1]{0}', space=sflag, size = 0x4, scoped, tag = 'scoped memory for simple_conv_forward.1']
    %16 = vsyncpa [#allocation3], 0
    // Predicated region
    $region2: #{simple_conv_forward.1} parent=1 // pred_check
      _
    $region3: #{simple_conv_forward.1} parent=1 // pred_check_branch
      %18 = sbr.rel (0) target = $region5
    $region4: #{simple_conv_forward.1} parent=1 // pred_region
      _
    $region5: #{simple_conv_forward.1} parent=1 // pred_fallthru
      _
    // Predicated region
    $region6: #{simple_conv_forward.1} parent=1 // pred_check
      _
    $region7: #{simple_conv_forward.1} parent=1 // pred_check_branch
      %20 = sbr.rel (0) target = $region9
    $region8: #{simple_conv_forward.1} parent=1 // pred_region
      _
    $region9: #{simple_conv_forward.1} parent=1 // pred_fallthru
      _
    // Predicated region
    $region10: #{simple_conv_forward.1} parent=1 // pred_check
      _
    $region11: #{simple_conv_forward.1} parent=1 // pred_check_branch
      %22 = sbr.rel (0) target = $region13
    $region12: #{simple_conv_forward.1} parent=1 // pred_region
      _
    $region13: #{simple_conv_forward.1} parent=1 // pred_fallthru
      _
    // Predicated region
    $region14: #{simple_conv_forward.1} parent=1 // pred_check
      _
    $region15: #{simple_conv_forward.1} parent=1 // pred_check_branch
      %24 = sbr.rel (0) target = $region17
    $region16: #{simple_conv_forward.1} parent=1 // pred_region
      _
    $region17: #{simple_conv_forward.1} parent=1 // pred_fallthru
      _
    // Predicated region
    $region18: #{simple_conv_forward.1} parent=1 // pred_check
      _
    $region19: #{simple_conv_forward.1} parent=1 // pred_check_branch
      %26 = sbr.rel (0) target = $region21
    $region20: #{simple_conv_forward.1} parent=1 // pred_region
      _
    $region21: #{simple_conv_forward.1} parent=1 // pred_fallthru
      _
    // Predicated region
    $region22: #{simple_conv_forward.1} parent=1 // pred_check
      _
    $region23: #{simple_conv_forward.1} parent=1 // pred_check_branch
      %28 = sbr.rel (0) target = $region25
    $region24: #{simple_conv_forward.1} parent=1 // pred_region
      _
    $region25: #{simple_conv_forward.1} parent=1 // pred_fallthru
      _
    // Predicated region
    $region26: #{simple_conv_forward.1} parent=1 // pred_check
      _
    $region27: #{simple_conv_forward.1} parent=1 // pred_check_branch
      %30 = sbr.rel (0) target = $region29
    $region28: #{simple_conv_forward.1} parent=1 // pred_region
      _
    $region29: #{simple_conv_forward.1} parent=1 // pred_fallthru
      _
    // Predicated region
    $region30: #{simple_conv_forward.1} parent=1 // pred_check
      _
    $region31: #{simple_conv_forward.1} parent=1 // pred_check_branch
      %32 = sbr.rel (0) target = $region33
    $region32: #{simple_conv_forward.1} parent=1 // pred_region
      _
    $region33: #{simple_conv_forward.1} parent=1 // pred_fallthru
      _
    // Predicated region
    $region34: #{simple_conv_forward.1} parent=1 // pred_check
      _
    $region35: #{simple_conv_forward.1} parent=1 // pred_check_branch
      %34 = sbr.rel (0) target = $region37
    $region36: #{simple_conv_forward.1} parent=1 // pred_region
      _
    $region37: #{simple_conv_forward.1} parent=1 // pred_fallthru
      _
    // Predicated region
    $region38: #{simple_conv_forward.1} parent=1 // pred_check
      _
    $region39: #{simple_conv_forward.1} parent=1 // pred_check_branch
      %36 = sbr.rel (0) target = $region41
    $region40: #{simple_conv_forward.1} parent=1 // pred_region
      _
    $region41: #{simple_conv_forward.1} parent=1 // pred_fallthru
      _
    // Predicated region
    $region42: #{simple_conv_forward.1} parent=1 // pred_check
      _
    $region43: #{simple_conv_forward.1} parent=1 // pred_check_branch
      %38 = sbr.rel (0) target = $region45
    $region44: #{simple_conv_forward.1} parent=1 // pred_region
      _
    $region45: #{simple_conv_forward.1} parent=1 // pred_fallthru
      _
    %v39 = vld [vmem:[%s0] sm:$0xff]
    %v40 = vld [vmem:[%s0 + $0x8] sm:$0xff]
    %v41 = vld [vmem:[%s0 + $0x10] sm:$0xff]
    %v42 = vld [vmem:[%s0 + $0x18] sm:$0xff]
    %v43 = vld [vmem:[%s0 + $0x20] sm:$0xff]
    %v44 = vld [vmem:[%s0 + $0x28] sm:$0xff]
    %v45 = vld [vmem:[%s0 + $0x30] sm:$0xff]
    %v46 = vld [vmem:[%s0 + $0x38] sm:$0xff]
    %v47 = vld [vmem:[%s1] sm:$0xff]
    %v48 = vld [vmem:[%s1 + $0x8] sm:$0xff]
    %v49 = vld [vmem:[%s1 + $0x10] sm:$0xff]
    %v50 = vld [vmem:[%s1 + $0x18] sm:$0xff]
    %v51 = vld [vmem:[%s1 + $0x20] sm:$0xff]
    %v52 = vld [vmem:[%s1 + $0x28] sm:$0xff]
    %v53 = vld [vmem:[%s1 + $0x30] sm:$0xff]
    %v54 = vld [vmem:[%s1 + $0x38] sm:$0xff]
    %v55 = vld [vmem:[%s1 + $0x40] sm:$0xff]
    %v56 = vld [vmem:[%s1 + $0x48] sm:$0xff]
    %v57 = vld [vmem:[%s1 + $0x50] sm:$0xff]
    %v58 = vld [vmem:[%s1 + $0x58] sm:$0xff]
    %v59 = vld [vmem:[%s1 + $0x60] sm:$0xff]
    %v60 = vld [vmem:[%s1 + $0x68] sm:$0xff]
    %v61 = vld [vmem:[%s1 + $0x70] sm:$0xff]
    %v62 = vld [vmem:[%s1 + $0x78] sm:$0xff]
    %v63 = vld [vmem:[%s1 + $0x80] sm:$0xff]
    %v64 = vld [vmem:[%s1 + $0x88] sm:$0xff]
    %v65 = vld [vmem:[%s1 + $0x90] sm:$0xff]
    %v66 = vld [vmem:[%s1 + $0x98] sm:$0xff]
    %v67 = vld [vmem:[%s1 + $0xa0] sm:$0xff]
    %v68 = vld [vmem:[%s1 + $0xa8] sm:$0xff]
    %v69 = vld [vmem:[%s1 + $0xb0] sm:$0xff]
    %v70 = vld [vmem:[%s1 + $0xb8] sm:$0xff]
    %79 = vrot.lane.b32.xlu0 %v39, 127
    %v80 = vpop.permute.xlu0 %79
    %81 = vrot.lane.b32.xlu0 %v40, 127
    %v82 = vpop.permute.xlu0 %81
    %83 = vrot.lane.b32.xlu0 %v41, 127
    %v84 = vpop.permute.xlu0 %83
    %85 = vrot.lane.b32.xlu0 %v42, 127
    %v86 = vpop.permute.xlu0 %85
    %87 = vrot.lane.b32.xlu0 %v43, 127
    %v88 = vpop.permute.xlu0 %87
    %89 = vrot.lane.b32.xlu0 %v44, 127
    %v90 = vpop.permute.xlu0 %89
    %91 = vrot.lane.b32.xlu0 %v45, 127
    %v92 = vpop.permute.xlu0 %91
    %93 = vrot.lane.b32.xlu0 %v46, 127
    %v94 = vpop.permute.xlu0 %93
    %103 = vrot.lane.b32.xlu0 %v39, 95
    %v104 = vpop.permute.xlu0 %103
    %105 = vrot.lane.b32.xlu0 %v40, 95
    %v106 = vpop.permute.xlu0 %105
    %107 = vrot.lane.b32.xlu0 %v41, 95
    %v108 = vpop.permute.xlu0 %107
    %109 = vrot.lane.b32.xlu0 %v42, 95
    %v110 = vpop.permute.xlu0 %109
    %111 = vrot.lane.b32.xlu0 %v43, 95
    %v112 = vpop.permute.xlu0 %111
    %113 = vrot.lane.b32.xlu0 %v44, 95
    %v114 = vpop.permute.xlu0 %113
    %115 = vrot.lane.b32.xlu0 %v45, 95
    %v116 = vpop.permute.xlu0 %115
    %117 = vrot.lane.b32.xlu0 %v46, 95
    %v118 = vpop.permute.xlu0 %117
    %vm127 = vcmask 777216
    %v128 = vsel %vm127, %v80, %v104
    %v129 = vsel %vm127, %v82, %v106
    %v130 = vsel %vm127, %v84, %v108
    %v131 = vsel %vm127, %v86, %v110
    %v132 = vsel %vm127, %v88, %v112
    %v133 = vsel %vm127, %v90, %v114
    %v134 = vsel %vm127, %v92, %v116
    %v135 = vsel %vm127, %v94, %v118
    %s136 = scalar_lea.vmem %s1, 192
    %v137 = vld [vmem:[%s136] sm:$0xff]
    %v138 = vld [vmem:[%s136 + $0x8] sm:$0xff]
    %v139 = vld [vmem:[%s136 + $0x10] sm:$0xff]
    %v140 = vld [vmem:[%s136 + $0x18] sm:$0xff]
    %v141 = vld [vmem:[%s136 + $0x20] sm:$0xff]
    %v142 = vld [vmem:[%s136 + $0x28] sm:$0xff]
    %v143 = vld [vmem:[%s136 + $0x30] sm:$0xff]
    %v144 = vld [vmem:[%s136 + $0x38] sm:$0xff]
    %v145 = vld [vmem:[%s136 + $0x40] sm:$0xff]
    %v146 = vld [vmem:[%s136 + $0x48] sm:$0xff]
    %v147 = vld [vmem:[%s136 + $0x50] sm:$0xff]
    %v148 = vld [vmem:[%s136 + $0x58] sm:$0xff]
    %v149 = vld [vmem:[%s136 + $0x60] sm:$0xff]
    %v150 = vld [vmem:[%s136 + $0x68] sm:$0xff]
    %v151 = vld [vmem:[%s136 + $0x70] sm:$0xff]
    %v152 = vld [vmem:[%s136 + $0x78] sm:$0xff]
    %v153 = vld [vmem:[%s136 + $0x80] sm:$0xff]
    %v154 = vld [vmem:[%s136 + $0x88] sm:$0xff]
    %v155 = vld [vmem:[%s136 + $0x90] sm:$0xff]
    %v156 = vld [vmem:[%s136 + $0x98] sm:$0xff]
    %v157 = vld [vmem:[%s136 + $0xa0] sm:$0xff]
    %v158 = vld [vmem:[%s136 + $0xa8] sm:$0xff]
    %v159 = vld [vmem:[%s136 + $0xb0] sm:$0xff]
    %v160 = vld [vmem:[%s136 + $0xb8] sm:$0xff]
    %vm161 = vcmask 785408
    %v163 = vsel %vm161, %v128, 0
    %v166 = vsel %vm161, %v129, 0
    %v169 = vsel %vm161, %v130, 0
    %v172 = vsel %vm161, %v131, 0
    %v175 = vsel %vm161, %v132, 0
    %v178 = vsel %vm161, %v133, 0
    %v181 = vsel %vm161, %v134, 0
    %v184 = vsel %vm161, %v135, 0
    %186 = vmatprep.subr.mxu0 0.0
    %187 = vmatpush1.msra.mxu0 0.0
    %188 = vmatprep.subr.mxu0 0.0
    %189 = vmatpush1.msra.mxu0 0.0
    %190 = vmatprep.subr.mxu0 0.0
    %191 = vmatpush1.msra.mxu0 0.0
    %192 = vmatprep.subr.mxu0 0.0
    %193 = vmatpush1.msra.mxu0 0.0
    %194 = vmatprep.subr.mxu0 %v160
    %195 = vmatpush1.msra.mxu0 %v159
    %196 = vmatprep.subr.mxu0 %v158
    %197 = vmatpush1.msra.mxu0 %v157
    %198 = vmatprep.subr.mxu0 %v156
    %199 = vmatpush1.msra.mxu0 %v155
    %200 = vmatprep.subr.mxu0 %v154
    %201 = vmatpush1.msra.mxu0 %v153
    %202 = vmatprep.subr.mxu0 %v152
    %203 = vmatpush1.msra.mxu0 %v151
    %204 = vmatprep.subr.mxu0 %v150
    %205 = vmatpush1.msra.mxu0 %v149
    %206 = vmatprep.subr.mxu0 %v148
    %207 = vmatpush1.msra.mxu0 %v147
    %208 = vmatprep.subr.mxu0 %v146
    %209 = vmatpush1.msra.mxu0 %v145
    %210 = vmatprep.subr.mxu0 %v144
    %211 = vmatpush1.msra.mxu0 %v143
    %212 = vmatprep.subr.mxu0 %v142
    %213 = vmatpush1.msra.mxu0 %v141
    %214 = vmatprep.subr.mxu0 %v140
    %215 = vmatpush1.msra.mxu0 %v139
    %216 = vmatprep.subr.mxu0 %v138
    %217 = vmatpush1.msra.mxu0 %v137
    %218 = vmatprep.subr.mxu0 0.0
    %219 = vmatpush2.msra.mxu0 0.0
    %220 = vmatprep.subr.mxu0 0.0
    %221 = vmatpush2.msra.mxu0 0.0
    %222 = vmatprep.subr.mxu0 0.0
    %223 = vmatpush2.msra.mxu0 0.0
    %224 = vmatprep.subr.mxu0 0.0
    %225 = vmatpush2.msra.mxu0 0.0
    %226 = vmatprep.subr.mxu0 0.0
    %227 = vmatpush2.msra.mxu0 0.0
    %228 = vmatprep.subr.mxu0 0.0
    %229 = vmatpush2.msra.mxu0 0.0
    %230 = vmatprep.subr.mxu0 0.0
    %231 = vmatpush2.msra.mxu0 0.0
    %232 = vmatprep.subr.mxu0 0.0
    %233 = vmatpush2.msra.mxu0 0.0
    %234 = vmatprep.subr.mxu0 0.0
    %235 = vmatpush2.msra.mxu0 0.0
    %236 = vmatprep.subr.mxu0 0.0
    %237 = vmatpush2.msra.mxu0 0.0
    %238 = vmatprep.subr.mxu0 0.0
    %239 = vmatpush2.msra.mxu0 0.0
    %240 = vmatprep.subr.mxu0 0.0
    %241 = vmatpush2.msra.mxu0 0.0
    %242 = vmatprep.subr.mxu0 0.0
    %243 = vmatpush2.msra.mxu0 0.0
    %244 = vmatprep.subr.mxu0 0.0
    %245 = vmatpush2.msra.mxu0 0.0
    %246 = vmatprep.subr.mxu0 0.0
    %247 = vmatpush2.msra.mxu0 0.0
    %248 = vmatprep.subr.mxu0 0.0
    %249 = vmatpush2.msra.mxu0 0.0
    %250 = vmatprep.mubr.f32.mxu0 0.0
    %251 = vmatmul.mubr.f32.gmra.mxu0 %v163
    %v252 = vpop.f32.mrf.mxu0
    %v253 = vadd.f32 0.0, %v252
    %v254 = vpop.f32.mrf.mxu0
    %v255 = vadd.f32 0.0, %v254
    %256 = vmatprep.mubr.f32.mxu0 0.0
    %257 = vmatmul.mubr.f32.gmra.mxu0 %v166
    %v258 = vpop.f32.mrf.mxu0
    %v259 = vadd.f32 0.0, %v258
    %v260 = vpop.f32.mrf.mxu0
    %v261 = vadd.f32 0.0, %v260
    %262 = vmatprep.mubr.f32.mxu0 0.0
    %263 = vmatmul.mubr.f32.gmra.mxu0 %v169
    %v264 = vpop.f32.mrf.mxu0
    %v265 = vadd.f32 0.0, %v264
    %v266 = vpop.f32.mrf.mxu0
    %v267 = vadd.f32 0.0, %v266
    %268 = vmatprep.mubr.f32.mxu0 0.0
    %269 = vmatmul.mubr.f32.gmra.mxu0 %v172
    %v270 = vpop.f32.mrf.mxu0
    %v271 = vadd.f32 0.0, %v270
    %v272 = vpop.f32.mrf.mxu0
    %v273 = vadd.f32 0.0, %v272
    %274 = vmatprep.mubr.f32.mxu0 0.0
    %275 = vmatmul.mubr.f32.gmra.mxu0 %v175
    %v276 = vpop.f32.mrf.mxu0
    %v277 = vadd.f32 0.0, %v276
    %v278 = vpop.f32.mrf.mxu0
    %v279 = vadd.f32 0.0, %v278
    %280 = vmatprep.mubr.f32.mxu0 0.0
    %281 = vmatmul.mubr.f32.gmra.mxu0 %v178
    %v282 = vpop.f32.mrf.mxu0
    %v283 = vadd.f32 0.0, %v282
    %v284 = vpop.f32.mrf.mxu0
    %v285 = vadd.f32 0.0, %v284
    %286 = vmatprep.mubr.f32.mxu0 0.0
    %287 = vmatmul.mubr.f32.gmra.mxu0 %v181
    %v288 = vpop.f32.mrf.mxu0
    %v289 = vadd.f32 0.0, %v288
    %v290 = vpop.f32.mrf.mxu0
    %v291 = vadd.f32 0.0, %v290
    %292 = vmatprep.mubr.f32.mxu0 0.0
    %293 = vmatmul.mubr.f32.gmra.mxu0 %v184
    %v294 = vpop.f32.mrf.mxu0
    %v295 = vadd.f32 0.0, %v294
    %v296 = vpop.f32.mrf.mxu0
    %v297 = vadd.f32 0.0, %v296
    %298 = vdwg.mxu0
    %v299 = vsel %vm161, %v39, 0
    %v301 = vsel %vm161, %v40, 0
    %v303 = vsel %vm161, %v41, 0
    %v305 = vsel %vm161, %v42, 0
    %v307 = vsel %vm161, %v43, 0
    %v309 = vsel %vm161, %v44, 0
    %v311 = vsel %vm161, %v45, 0
    %v313 = vsel %vm161, %v46, 0
    %315 = vmatprep.subr.mxu0 0.0
    %316 = vmatpush1.msra.mxu0 0.0
    %317 = vmatprep.subr.mxu0 0.0
    %318 = vmatpush1.msra.mxu0 0.0
    %319 = vmatprep.subr.mxu0 0.0
    %320 = vmatpush1.msra.mxu0 0.0
    %321 = vmatprep.subr.mxu0 0.0
    %322 = vmatpush1.msra.mxu0 0.0
    %323 = vmatprep.subr.mxu0 %v70
    %324 = vmatpush1.msra.mxu0 %v69
    %325 = vmatprep.subr.mxu0 %v68
    %326 = vmatpush1.msra.mxu0 %v67
    %327 = vmatprep.subr.mxu0 %v66
    %328 = vmatpush1.msra.mxu0 %v65
    %329 = vmatprep.subr.mxu0 %v64
    %330 = vmatpush1.msra.mxu0 %v63
    %331 = vmatprep.subr.mxu0 %v62
    %332 = vmatpush1.msra.mxu0 %v61
    %333 = vmatprep.subr.mxu0 %v60
    %334 = vmatpush1.msra.mxu0 %v59
    %335 = vmatprep.subr.mxu0 %v58
    %336 = vmatpush1.msra.mxu0 %v57
    %337 = vmatprep.subr.mxu0 %v56
    %338 = vmatpush1.msra.mxu0 %v55
    %339 = vmatprep.subr.mxu0 %v54
    %340 = vmatpush1.msra.mxu0 %v53
    %341 = vmatprep.subr.mxu0 %v52
    %342 = vmatpush1.msra.mxu0 %v51
    %343 = vmatprep.subr.mxu0 %v50
    %344 = vmatpush1.msra.mxu0 %v49
    %345 = vmatprep.subr.mxu0 %v48
    %346 = vmatpush1.msra.mxu0 %v47
    %347 = vmatprep.subr.mxu0 0.0
    %348 = vmatpush2.msra.mxu0 0.0
    %349 = vmatprep.subr.mxu0 0.0
    %350 = vmatpush2.msra.mxu0 0.0
    %351 = vmatprep.subr.mxu0 0.0
    %352 = vmatpush2.msra.mxu0 0.0
    %353 = vmatprep.subr.mxu0 0.0
    %354 = vmatpush2.msra.mxu0 0.0
    %355 = vmatprep.subr.mxu0 0.0
    %356 = vmatpush2.msra.mxu0 0.0
    %357 = vmatprep.subr.mxu0 0.0
    %358 = vmatpush2.msra.mxu0 0.0
    %359 = vmatprep.subr.mxu0 0.0
    %360 = vmatpush2.msra.mxu0 0.0
    %361 = vmatprep.subr.mxu0 0.0
    %362 = vmatpush2.msra.mxu0 0.0
    %363 = vmatprep.subr.mxu0 0.0
    %364 = vmatpush2.msra.mxu0 0.0
    %365 = vmatprep.subr.mxu0 0.0
    %366 = vmatpush2.msra.mxu0 0.0
    %367 = vmatprep.subr.mxu0 0.0
    %368 = vmatpush2.msra.mxu0 0.0
    %369 = vmatprep.subr.mxu0 0.0
    %370 = vmatpush2.msra.mxu0 0.0
    %371 = vmatprep.subr.mxu0 0.0
    %372 = vmatpush2.msra.mxu0 0.0
    %373 = vmatprep.subr.mxu0 0.0
    %374 = vmatpush2.msra.mxu0 0.0
    %375 = vmatprep.subr.mxu0 0.0
    %376 = vmatpush2.msra.mxu0 0.0
    %377 = vmatprep.subr.mxu0 0.0
    %378 = vmatpush2.msra.mxu0 0.0
    %379 = vmatprep.mubr.f32.mxu0 0.0
    %380 = vmatmul.mubr.f32.gmra.mxu0 %v299
    %v381 = vpop.f32.mrf.mxu0
    %v382 = vadd.f32 %v253, %v381
    %v383 = vpop.f32.mrf.mxu0
    %v384 = vadd.f32 %v255, %v383
    %385 = vmatprep.mubr.f32.mxu0 0.0
    %386 = vmatmul.mubr.f32.gmra.mxu0 %v301
    %v387 = vpop.f32.mrf.mxu0
    %v388 = vadd.f32 %v259, %v387
    %v389 = vpop.f32.mrf.mxu0
    %v390 = vadd.f32 %v261, %v389
    %391 = vmatprep.mubr.f32.mxu0 0.0
    %392 = vmatmul.mubr.f32.gmra.mxu0 %v303
    %v393 = vpop.f32.mrf.mxu0
    %v394 = vadd.f32 %v265, %v393
    %v395 = vpop.f32.mrf.mxu0
    %v396 = vadd.f32 %v267, %v395
    %397 = vmatprep.mubr.f32.mxu0 0.0
    %398 = vmatmul.mubr.f32.gmra.mxu0 %v305
    %v399 = vpop.f32.mrf.mxu0
    %v400 = vadd.f32 %v271, %v399
    %v401 = vpop.f32.mrf.mxu0
    %v402 = vadd.f32 %v273, %v401
    %403 = vmatprep.mubr.f32.mxu0 0.0
    %404 = vmatmul.mubr.f32.gmra.mxu0 %v307
    %v405 = vpop.f32.mrf.mxu0
    %v406 = vadd.f32 %v277, %v405
    %v407 = vpop.f32.mrf.mxu0
    %v408 = vadd.f32 %v279, %v407
    %409 = vmatprep.mubr.f32.mxu0 0.0
    %410 = vmatmul.mubr.f32.gmra.mxu0 %v309
    %v411 = vpop.f32.mrf.mxu0
    %v412 = vadd.f32 %v283, %v411
    %v413 = vpop.f32.mrf.mxu0
    %v414 = vadd.f32 %v285, %v413
    %415 = vmatprep.mubr.f32.mxu0 0.0
    %416 = vmatmul.mubr.f32.gmra.mxu0 %v311
    %v417 = vpop.f32.mrf.mxu0
    %v418 = vadd.f32 %v289, %v417
    %v419 = vpop.f32.mrf.mxu0
    %v420 = vadd.f32 %v291, %v419
    %421 = vmatprep.mubr.f32.mxu0 0.0
    %422 = vmatmul.mubr.f32.gmra.mxu0 %v313
    %v423 = vpop.f32.mrf.mxu0
    %v424 = vadd.f32 %v295, %v423
    %v425 = vpop.f32.mrf.mxu0
    %v426 = vadd.f32 %v297, %v425
    %427 = vdwg.mxu0
    %vm428 = vcmask 1046528
    %v429 = vrot.slane %v39, 1
    %v430 = vrot.slane %v40, 1
    %v431 = vsel %vm428, %v429, %v430
    %v432 = vrot.slane %v41, 1
    %v433 = vsel %vm428, %v430, %v432
    %v434 = vrot.slane %v42, 1
    %v435 = vsel %vm428, %v432, %v434
    %v436 = vrot.slane %v43, 1
    %v437 = vsel %vm428, %v434, %v436
    %v438 = vrot.slane %v44, 1
    %v439 = vsel %vm428, %v436, %v438
    %v440 = vrot.slane %v45, 1
    %v441 = vsel %vm428, %v438, %v440
    %v442 = vrot.slane %v46, 1
    %v443 = vsel %vm428, %v440, %v442
    %v446 = vsel %vm428, %v442, %v429
    %s447 = scalar_lea.vmem %s1, 384
    %v448 = vld [vmem:[%s447] sm:$0xff]
    %v449 = vld [vmem:[%s447 + $0x8] sm:$0xff]
    %v450 = vld [vmem:[%s447 + $0x10] sm:$0xff]
    %v451 = vld [vmem:[%s447 + $0x18] sm:$0xff]
    %v452 = vld [vmem:[%s447 + $0x20] sm:$0xff]
    %v453 = vld [vmem:[%s447 + $0x28] sm:$0xff]
    %v454 = vld [vmem:[%s447 + $0x30] sm:$0xff]
    %v455 = vld [vmem:[%s447 + $0x38] sm:$0xff]
    %v456 = vld [vmem:[%s447 + $0x40] sm:$0xff]
    %v457 = vld [vmem:[%s447 + $0x48] sm:$0xff]
    %v458 = vld [vmem:[%s447 + $0x50] sm:$0xff]
    %v459 = vld [vmem:[%s447 + $0x58] sm:$0xff]
    %v460 = vld [vmem:[%s447 + $0x60] sm:$0xff]
    %v461 = vld [vmem:[%s447 + $0x68] sm:$0xff]
    %v462 = vld [vmem:[%s447 + $0x70] sm:$0xff]
    %v463 = vld [vmem:[%s447 + $0x78] sm:$0xff]
    %v464 = vld [vmem:[%s447 + $0x80] sm:$0xff]
    %v465 = vld [vmem:[%s447 + $0x88] sm:$0xff]
    %v466 = vld [vmem:[%s447 + $0x90] sm:$0xff]
    %v467 = vld [vmem:[%s447 + $0x98] sm:$0xff]
    %v468 = vld [vmem:[%s447 + $0xa0] sm:$0xff]
    %v469 = vld [vmem:[%s447 + $0xa8] sm:$0xff]
    %v470 = vld [vmem:[%s447 + $0xb0] sm:$0xff]
    %v471 = vld [vmem:[%s447 + $0xb8] sm:$0xff]
    %v472 = vsel %vm161, %v431, 0
    %v474 = vsel %vm161, %v433, 0
    %v476 = vsel %vm161, %v435, 0
    %v478 = vsel %vm161, %v437, 0
    %v480 = vsel %vm161, %v439, 0
    %v482 = vsel %vm161, %v441, 0
    %v484 = vsel %vm161, %v443, 0
    %v487 = vsel %vm161, %v446, 0
    %489 = vmatprep.subr.mxu0 0.0
    %490 = vmatpush1.msra.mxu0 0.0
    %491 = vmatprep.subr.mxu0 0.0
    %492 = vmatpush1.msra.mxu0 0.0
    %493 = vmatprep.subr.mxu0 0.0
    %494 = vmatpush1.msra.mxu0 0.0
    %495 = vmatprep.subr.mxu0 0.0
    %496 = vmatpush1.msra.mxu0 0.0
    %497 = vmatprep.subr.mxu0 %v471
    %498 = vmatpush1.msra.mxu0 %v470
    %499 = vmatprep.subr.mxu0 %v469
    %500 = vmatpush1.msra.mxu0 %v468
    %501 = vmatprep.subr.mxu0 %v467
    %502 = vmatpush1.msra.mxu0 %v466
    %503 = vmatprep.subr.mxu0 %v465
    %504 = vmatpush1.msra.mxu0 %v464
    %505 = vmatprep.subr.mxu0 %v463
    %506 = vmatpush1.msra.mxu0 %v462
    %507 = vmatprep.subr.mxu0 %v461
    %508 = vmatpush1.msra.mxu0 %v460
    %509 = vmatprep.subr.mxu0 %v459
    %510 = vmatpush1.msra.mxu0 %v458
    %511 = vmatprep.subr.mxu0 %v457
    %512 = vmatpush1.msra.mxu0 %v456
    %513 = vmatprep.subr.mxu0 %v455
    %514 = vmatpush1.msra.mxu0 %v454
    %515 = vmatprep.subr.mxu0 %v453
    %516 = vmatpush1.msra.mxu0 %v452
    %517 = vmatprep.subr.mxu0 %v451
    %518 = vmatpush1.msra.mxu0 %v450
    %519 = vmatprep.subr.mxu0 %v449
    %520 = vmatpush1.msra.mxu0 %v448
    %521 = vmatprep.subr.mxu0 0.0
    %522 = vmatpush2.msra.mxu0 0.0
    %523 = vmatprep.subr.mxu0 0.0
    %524 = vmatpush2.msra.mxu0 0.0
    %525 = vmatprep.subr.mxu0 0.0
    %526 = vmatpush2.msra.mxu0 0.0
    %527 = vmatprep.subr.mxu0 0.0
    %528 = vmatpush2.msra.mxu0 0.0
    %529 = vmatprep.subr.mxu0 0.0
    %530 = vmatpush2.msra.mxu0 0.0
    %531 = vmatprep.subr.mxu0 0.0
    %532 = vmatpush2.msra.mxu0 0.0
    %533 = vmatprep.subr.mxu0 0.0
    %534 = vmatpush2.msra.mxu0 0.0
    %535 = vmatprep.subr.mxu0 0.0
    %536 = vmatpush2.msra.mxu0 0.0
    %537 = vmatprep.subr.mxu0 0.0
    %538 = vmatpush2.msra.mxu0 0.0
    %539 = vmatprep.subr.mxu0 0.0
    %540 = vmatpush2.msra.mxu0 0.0
    %541 = vmatprep.subr.mxu0 0.0
    %542 = vmatpush2.msra.mxu0 0.0
    %543 = vmatprep.subr.mxu0 0.0
    %544 = vmatpush2.msra.mxu0 0.0
    %545 = vmatprep.subr.mxu0 0.0
    %546 = vmatpush2.msra.mxu0 0.0
    %547 = vmatprep.subr.mxu0 0.0
    %548 = vmatpush2.msra.mxu0 0.0
    %549 = vmatprep.subr.mxu0 0.0
    %550 = vmatpush2.msra.mxu0 0.0
    %551 = vmatprep.subr.mxu0 0.0
    %552 = vmatpush2.msra.mxu0 0.0
    %553 = vmatprep.mubr.f32.mxu0 0.0
    %554 = vmatmul.mubr.f32.gmra.mxu0 %v472
    %v555 = vpop.f32.mrf.mxu0
    %v556 = vadd.f32 0.0, %v555
    %v557 = vpop.f32.mrf.mxu0
    %v558 = vadd.f32 0.0, %v557
    %559 = vmatprep.mubr.f32.mxu0 0.0
    %560 = vmatmul.mubr.f32.gmra.mxu0 %v474
    %v561 = vpop.f32.mrf.mxu0
    %v562 = vadd.f32 0.0, %v561
    %v563 = vpop.f32.mrf.mxu0
    %v564 = vadd.f32 0.0, %v563
    %565 = vmatprep.mubr.f32.mxu0 0.0
    %566 = vmatmul.mubr.f32.gmra.mxu0 %v476
    %v567 = vpop.f32.mrf.mxu0
    %v568 = vadd.f32 0.0, %v567
    %v569 = vpop.f32.mrf.mxu0
    %v570 = vadd.f32 0.0, %v569
    %571 = vmatprep.mubr.f32.mxu0 0.0
    %572 = vmatmul.mubr.f32.gmra.mxu0 %v478
    %v573 = vpop.f32.mrf.mxu0
    %v574 = vadd.f32 0.0, %v573
    %v575 = vpop.f32.mrf.mxu0
    %v576 = vadd.f32 0.0, %v575
    %577 = vmatprep.mubr.f32.mxu0 0.0
    %578 = vmatmul.mubr.f32.gmra.mxu0 %v480
    %v579 = vpop.f32.mrf.mxu0
    %v580 = vadd.f32 0.0, %v579
    %v581 = vpop.f32.mrf.mxu0
    %v582 = vadd.f32 0.0, %v581
    %583 = vmatprep.mubr.f32.mxu0 0.0
    %584 = vmatmul.mubr.f32.gmra.mxu0 %v482
    %v585 = vpop.f32.mrf.mxu0
    %v586 = vadd.f32 0.0, %v585
    %v587 = vpop.f32.mrf.mxu0
    %v588 = vadd.f32 0.0, %v587
    %589 = vmatprep.mubr.f32.mxu0 0.0
    %590 = vmatmul.mubr.f32.gmra.mxu0 %v484
    %v591 = vpop.f32.mrf.mxu0
    %v592 = vadd.f32 0.0, %v591
    %v593 = vpop.f32.mrf.mxu0
    %v594 = vadd.f32 0.0, %v593
    %595 = vmatprep.mubr.f32.mxu0 0.0
    %596 = vmatmul.mubr.f32.gmra.mxu0 %v487
    %v597 = vpop.f32.mrf.mxu0
    %v598 = vadd.f32 0.0, %v597
    %v599 = vpop.f32.mrf.mxu0
    %v600 = vadd.f32 0.0, %v599
    %601 = vdwg.mxu0
    %v602 = vadd.f32 %v382, %v556
    %v603 = vadd.f32 %v384, %v558
    %v604 = vadd.f32 %v388, %v562
    %v605 = vadd.f32 %v390, %v564
    %v606 = vadd.f32 %v394, %v568
    %v607 = vadd.f32 %v396, %v570
    %v608 = vadd.f32 %v400, %v574
    %v609 = vadd.f32 %v402, %v576
    %v610 = vadd.f32 %v406, %v580
    %v611 = vadd.f32 %v408, %v582
    %v612 = vadd.f32 %v412, %v586
    %v613 = vadd.f32 %v414, %v588
    %v614 = vadd.f32 %v418, %v592
    %v615 = vadd.f32 %v420, %v594
    %v616 = vadd.f32 %v424, %v598
    %v617 = vadd.f32 %v426, %v600
    %618 = vrot.lane.b32.xlu0 %v431, 127
    %v619 = vpop.permute.xlu0 %618
    %620 = vrot.lane.b32.xlu0 %v433, 127
    %v621 = vpop.permute.xlu0 %620
    %622 = vrot.lane.b32.xlu0 %v435, 127
    %v623 = vpop.permute.xlu0 %622
    %624 = vrot.lane.b32.xlu0 %v437, 127
    %v625 = vpop.permute.xlu0 %624
    %626 = vrot.lane.b32.xlu0 %v439, 127
    %v627 = vpop.permute.xlu0 %626
    %628 = vrot.lane.b32.xlu0 %v441, 127
    %v629 = vpop.permute.xlu0 %628
    %630 = vrot.lane.b32.xlu0 %v443, 127
    %v631 = vpop.permute.xlu0 %630
    %632 = vrot.lane.b32.xlu0 %v446, 127
    %v633 = vpop.permute.xlu0 %632
    %642 = vrot.lane.b32.xlu0 %v431, 95
    %v643 = vpop.permute.xlu0 %642
    %644 = vrot.lane.b32.xlu0 %v433, 95
    %v645 = vpop.permute.xlu0 %644
    %646 = vrot.lane.b32.xlu0 %v435, 95
    %v647 = vpop.permute.xlu0 %646
    %648 = vrot.lane.b32.xlu0 %v437, 95
    %v649 = vpop.permute.xlu0 %648
    %650 = vrot.lane.b32.xlu0 %v439, 95
    %v651 = vpop.permute.xlu0 %650
    %652 = vrot.lane.b32.xlu0 %v441, 95
    %v653 = vpop.permute.xlu0 %652
    %654 = vrot.lane.b32.xlu0 %v443, 95
    %v655 = vpop.permute.xlu0 %654
    %656 = vrot.lane.b32.xlu0 %v446, 95
    %v657 = vpop.permute.xlu0 %656
    %v666 = vsel %vm127, %v619, %v643
    %v667 = vsel %vm127, %v621, %v645
    %v668 = vsel %vm127, %v623, %v647
    %v669 = vsel %vm127, %v625, %v649
    %v670 = vsel %vm127, %v627, %v651
    %v671 = vsel %vm127, %v629, %v653
    %v672 = vsel %vm127, %v631, %v655
    %v673 = vsel %vm127, %v633, %v657
    %s674 = scalar_lea.vmem %s1, 576
    %v675 = vld [vmem:[%s674] sm:$0xff]
    %v676 = vld [vmem:[%s674 + $0x8] sm:$0xff]
    %v677 = vld [vmem:[%s674 + $0x10] sm:$0xff]
    %v678 = vld [vmem:[%s674 + $0x18] sm:$0xff]
    %v679 = vld [vmem:[%s674 + $0x20] sm:$0xff]
    %v680 = vld [vmem:[%s674 + $0x28] sm:$0xff]
    %v681 = vld [vmem:[%s674 + $0x30] sm:$0xff]
    %v682 = vld [vmem:[%s674 + $0x38] sm:$0xff]
    %v683 = vld [vmem:[%s674 + $0x40] sm:$0xff]
    %v684 = vld [vmem:[%s674 + $0x48] sm:$0xff]
    %v685 = vld [vmem:[%s674 + $0x50] sm:$0xff]
    %v686 = vld [vmem:[%s674 + $0x58] sm:$0xff]
    %v687 = vld [vmem:[%s674 + $0x60] sm:$0xff]
    %v688 = vld [vmem:[%s674 + $0x68] sm:$0xff]
    %v689 = vld [vmem:[%s674 + $0x70] sm:$0xff]
    %v690 = vld [vmem:[%s674 + $0x78] sm:$0xff]
    %v691 = vld [vmem:[%s674 + $0x80] sm:$0xff]
    %v692 = vld [vmem:[%s674 + $0x88] sm:$0xff]
    %v693 = vld [vmem:[%s674 + $0x90] sm:$0xff]
    %v694 = vld [vmem:[%s674 + $0x98] sm:$0xff]
    %v695 = vld [vmem:[%s674 + $0xa0] sm:$0xff]
    %v696 = vld [vmem:[%s674 + $0xa8] sm:$0xff]
    %v697 = vld [vmem:[%s674 + $0xb0] sm:$0xff]
    %v698 = vld [vmem:[%s674 + $0xb8] sm:$0xff]
    %v700 = vsel %vm161, %v666, 0
    %v703 = vsel %vm161, %v667, 0
    %v706 = vsel %vm161, %v668, 0
    %v709 = vsel %vm161, %v669, 0
    %v712 = vsel %vm161, %v670, 0
    %v715 = vsel %vm161, %v671, 0
    %v718 = vsel %vm161, %v672, 0
    %v721 = vsel %vm161, %v673, 0
    %723 = vmatprep.subr.mxu0 0.0
    %724 = vmatpush1.msra.mxu0 0.0
    %725 = vmatprep.subr.mxu0 0.0
    %726 = vmatpush1.msra.mxu0 0.0
    %727 = vmatprep.subr.mxu0 0.0
    %728 = vmatpush1.msra.mxu0 0.0
    %729 = vmatprep.subr.mxu0 0.0
    %730 = vmatpush1.msra.mxu0 0.0
    %731 = vmatprep.subr.mxu0 %v698
    %732 = vmatpush1.msra.mxu0 %v697
    %733 = vmatprep.subr.mxu0 %v696
    %734 = vmatpush1.msra.mxu0 %v695
    %735 = vmatprep.subr.mxu0 %v694
    %736 = vmatpush1.msra.mxu0 %v693
    %737 = vmatprep.subr.mxu0 %v692
    %738 = vmatpush1.msra.mxu0 %v691
    %739 = vmatprep.subr.mxu0 %v690
    %740 = vmatpush1.msra.mxu0 %v689
    %741 = vmatprep.subr.mxu0 %v688
    %742 = vmatpush1.msra.mxu0 %v687
    %743 = vmatprep.subr.mxu0 %v686
    %744 = vmatpush1.msra.mxu0 %v685
    %745 = vmatprep.subr.mxu0 %v684
    %746 = vmatpush1.msra.mxu0 %v683
    %747 = vmatprep.subr.mxu0 %v682
    %748 = vmatpush1.msra.mxu0 %v681
    %749 = vmatprep.subr.mxu0 %v680
    %750 = vmatpush1.msra.mxu0 %v679
    %751 = vmatprep.subr.mxu0 %v678
    %752 = vmatpush1.msra.mxu0 %v677
    %753 = vmatprep.subr.mxu0 %v676
    %754 = vmatpush1.msra.mxu0 %v675
    %755 = vmatprep.subr.mxu0 0.0
    %756 = vmatpush2.msra.mxu0 0.0
    %757 = vmatprep.subr.mxu0 0.0
    %758 = vmatpush2.msra.mxu0 0.0
    %759 = vmatprep.subr.mxu0 0.0
    %760 = vmatpush2.msra.mxu0 0.0
    %761 = vmatprep.subr.mxu0 0.0
    %762 = vmatpush2.msra.mxu0 0.0
    %763 = vmatprep.subr.mxu0 0.0
    %764 = vmatpush2.msra.mxu0 0.0
    %765 = vmatprep.subr.mxu0 0.0
    %766 = vmatpush2.msra.mxu0 0.0
    %767 = vmatprep.subr.mxu0 0.0
    %768 = vmatpush2.msra.mxu0 0.0
    %769 = vmatprep.subr.mxu0 0.0
    %770 = vmatpush2.msra.mxu0 0.0
    %771 = vmatprep.subr.mxu0 0.0
    %772 = vmatpush2.msra.mxu0 0.0
    %773 = vmatprep.subr.mxu0 0.0
    %774 = vmatpush2.msra.mxu0 0.0
    %775 = vmatprep.subr.mxu0 0.0
    %776 = vmatpush2.msra.mxu0 0.0
    %777 = vmatprep.subr.mxu0 0.0
    %778 = vmatpush2.msra.mxu0 0.0
    %779 = vmatprep.subr.mxu0 0.0
    %780 = vmatpush2.msra.mxu0 0.0
    %781 = vmatprep.subr.mxu0 0.0
    %782 = vmatpush2.msra.mxu0 0.0
    %783 = vmatprep.subr.mxu0 0.0
    %784 = vmatpush2.msra.mxu0 0.0
    %785 = vmatprep.subr.mxu0 0.0
    %786 = vmatpush2.msra.mxu0 0.0
    %787 = vmatprep.mubr.f32.mxu0 0.0
    %788 = vmatmul.mubr.f32.gmra.mxu0 %v700
    %v789 = vpop.f32.mrf.mxu0
    %v790 = vadd.f32 0.0, %v789
    %v791 = vpop.f32.mrf.mxu0
    %v792 = vadd.f32 0.0, %v791
    %793 = vmatprep.mubr.f32.mxu0 0.0
    %794 = vmatmul.mubr.f32.gmra.mxu0 %v703
    %v795 = vpop.f32.mrf.mxu0
    %v796 = vadd.f32 0.0, %v795
    %v797 = vpop.f32.mrf.mxu0
    %v798 = vadd.f32 0.0, %v797
    %799 = vmatprep.mubr.f32.mxu0 0.0
    %800 = vmatmul.mubr.f32.gmra.mxu0 %v706
    %v801 = vpop.f32.mrf.mxu0
    %v802 = vadd.f32 0.0, %v801
    %v803 = vpop.f32.mrf.mxu0
    %v804 = vadd.f32 0.0, %v803
    %805 = vmatprep.mubr.f32.mxu0 0.0
    %806 = vmatmul.mubr.f32.gmra.mxu0 %v709
    %v807 = vpop.f32.mrf.mxu0
    %v808 = vadd.f32 0.0, %v807
    %v809 = vpop.f32.mrf.mxu0
    %v810 = vadd.f32 0.0, %v809
    %811 = vmatprep.mubr.f32.mxu0 0.0
    %812 = vmatmul.mubr.f32.gmra.mxu0 %v712
    %v813 = vpop.f32.mrf.mxu0
    %v814 = vadd.f32 0.0, %v813
    %v815 = vpop.f32.mrf.mxu0
    %v816 = vadd.f32 0.0, %v815
    %817 = vmatprep.mubr.f32.mxu0 0.0
    %818 = vmatmul.mubr.f32.gmra.mxu0 %v715
    %v819 = vpop.f32.mrf.mxu0
    %v820 = vadd.f32 0.0, %v819
    %v821 = vpop.f32.mrf.mxu0
    %v822 = vadd.f32 0.0, %v821
    %823 = vmatprep.mubr.f32.mxu0 0.0
    %824 = vmatmul.mubr.f32.gmra.mxu0 %v718
    %v825 = vpop.f32.mrf.mxu0
    %v826 = vadd.f32 0.0, %v825
    %v827 = vpop.f32.mrf.mxu0
    %v828 = vadd.f32 0.0, %v827
    %829 = vmatprep.mubr.f32.mxu0 0.0
    %830 = vmatmul.mubr.f32.gmra.mxu0 %v721
    %v831 = vpop.f32.mrf.mxu0
    %v832 = vadd.f32 0.0, %v831
    %v833 = vpop.f32.mrf.mxu0
    %v834 = vadd.f32 0.0, %v833
    %835 = vdwg.mxu0
    %v836 = vadd.f32 %v602, %v790
    %v837 = vadd.f32 %v603, %v792
    %v838 = vadd.f32 %v604, %v796
    %v839 = vadd.f32 %v605, %v798
    %v840 = vadd.f32 %v606, %v802
    %v841 = vadd.f32 %v607, %v804
    %v842 = vadd.f32 %v608, %v808
    %v843 = vadd.f32 %v609, %v810
    %v844 = vadd.f32 %v610, %v814
    %v845 = vadd.f32 %v611, %v816
    %v846 = vadd.f32 %v612, %v820
    %v847 = vadd.f32 %v613, %v822
    %v848 = vadd.f32 %v614, %v826
    %v849 = vadd.f32 %v615, %v828
    %v850 = vadd.f32 %v616, %v832
    %v851 = vadd.f32 %v617, %v834
    %v852 = vld [vmem:[%s2] sm:$0x3]
    %v854 = vlaneseq
    %v855 = vshrl.u32 %v854, 7
    %v856 = vsub.s32 0, %v855
    %v857 = vrot.slane %v852, %v856
    %v858 = vlaneseq
    %v859 = vshrl.u32 %v858, 7
    %v860 = vsub.s32 1, %v859
    %v861 = vrot.slane %v852, %v860
    %v864 = vadd.f32 %v836, %v857
    %v865 = vadd.f32 %v837, %v861
    %v866 = vadd.f32 %v838, %v857
    %v867 = vadd.f32 %v839, %v861
    %v868 = vadd.f32 %v840, %v857
    %v869 = vadd.f32 %v841, %v861
    %v870 = vadd.f32 %v842, %v857
    %v871 = vadd.f32 %v843, %v861
    %v872 = vadd.f32 %v844, %v857
    %v873 = vadd.f32 %v845, %v861
    %v874 = vadd.f32 %v846, %v857
    %v875 = vadd.f32 %v847, %v861
    %v876 = vadd.f32 %v848, %v857
    %v877 = vadd.f32 %v849, %v861
    %v878 = vadd.f32 %v850, %v857
    %v879 = vadd.f32 %v851, %v861
    %v896 = vrot.slane %v864, 1
    %v897 = vrot.slane %v866, 1
    %v898 = vsel %vm428, %v896, %v897
    %v899 = vrot.slane %v865, 1
    %v900 = vrot.slane %v867, 1
    %v901 = vsel %vm428, %v899, %v900
    %v902 = vrot.slane %v868, 1
    %v903 = vsel %vm428, %v897, %v902
    %v904 = vrot.slane %v869, 1
    %v905 = vsel %vm428, %v900, %v904
    %v906 = vrot.slane %v870, 1
    %v907 = vsel %vm428, %v902, %v906
    %v908 = vrot.slane %v871, 1
    %v909 = vsel %vm428, %v904, %v908
    %v910 = vrot.slane %v872, 1
    %v911 = vsel %vm428, %v906, %v910
    %v912 = vrot.slane %v873, 1
    %v913 = vsel %vm428, %v908, %v912
    %v914 = vrot.slane %v874, 1
    %v915 = vsel %vm428, %v910, %v914
    %v916 = vrot.slane %v875, 1
    %v917 = vsel %vm428, %v912, %v916
    %v918 = vrot.slane %v876, 1
    %v919 = vsel %vm428, %v914, %v918
    %v920 = vrot.slane %v877, 1
    %v921 = vsel %vm428, %v916, %v920
    %v922 = vrot.slane %v878, 1
    %v923 = vsel %vm428, %v918, %v922
    %v924 = vrot.slane %v879, 1
    %v925 = vsel %vm428, %v920, %v924
    %v944 = vsel %vm428, %v922, %v896
    %v945 = vsel %vm428, %v924, %v899
    %v946 = vmax.f32 %v864, %v898
    %v947 = vmax.f32 %v865, %v901
    %v948 = vmax.f32 %v866, %v903
    %v949 = vmax.f32 %v867, %v905
    %v950 = vmax.f32 %v868, %v907
    %v951 = vmax.f32 %v869, %v909
    %v952 = vmax.f32 %v870, %v911
    %v953 = vmax.f32 %v871, %v913
    %v954 = vmax.f32 %v872, %v915
    %v955 = vmax.f32 %v873, %v917
    %v956 = vmax.f32 %v874, %v919
    %v957 = vmax.f32 %v875, %v921
    %v958 = vmax.f32 %v876, %v923
    %v959 = vmax.f32 %v877, %v925
    %v960 = vmax.f32 %v878, %v944
    %v961 = vmax.f32 %v879, %v945
    %v962 = vld [vmem:[%s3] sm:$0xff]
    %v963 = vld [vmem:[%s3 + $0x8] sm:$0xff]
    %v964 = vld [vmem:[%s3 + $0x10] sm:$0xff]
    %v965 = vld [vmem:[%s3 + $0x18] sm:$0xff]
    %vm966 = vcmask 523264
    %v968 = vsel %vm966, %v962, 0
    %v971 = vsel %vm966, %v963, 0
    %v974 = vsel %vm966, %v964, 0
    %v977 = vsel %vm966, %v965, 0
    %979 = vmatprep.subr.mxu0 0.0
    %980 = vmatpush1.msra.mxu0 0.0
    %981 = vmatprep.subr.mxu0 0.0
    %982 = vmatpush1.msra.mxu0 0.0
    %983 = vmatprep.subr.mxu0 0.0
    %984 = vmatpush1.msra.mxu0 0.0
    %985 = vmatprep.subr.mxu0 0.0
    %986 = vmatpush1.msra.mxu0 0.0
    %987 = vmatprep.subr.mxu0 0.0
    %988 = vmatpush1.msra.mxu0 0.0
    %989 = vmatprep.subr.mxu0 0.0
    %990 = vmatpush1.msra.mxu0 0.0
    %991 = vmatprep.subr.mxu0 0.0
    %992 = vmatpush1.msra.mxu0 0.0
    %993 = vmatprep.subr.mxu0 0.0
    %994 = vmatpush1.msra.mxu0 0.0
    %995 = vmatprep.subr.mxu0 %v961
    %996 = vmatpush1.msra.mxu0 %v960
    %997 = vmatprep.subr.mxu0 %v959
    %998 = vmatpush1.msra.mxu0 %v958
    %999 = vmatprep.subr.mxu0 %v957
    %1000 = vmatpush1.msra.mxu0 %v956
    %1001 = vmatprep.subr.mxu0 %v955
    %1002 = vmatpush1.msra.mxu0 %v954
    %1003 = vmatprep.subr.mxu0 %v953
    %1004 = vmatpush1.msra.mxu0 %v952
    %1005 = vmatprep.subr.mxu0 %v951
    %1006 = vmatpush1.msra.mxu0 %v950
    %1007 = vmatprep.subr.mxu0 %v949
    %1008 = vmatpush1.msra.mxu0 %v948
    %1009 = vmatprep.subr.mxu0 %v947
    %1010 = vmatpush1.msra.mxu0 %v946
    %1011 = vmatprep.subr.mxu0 0.0
    %1012 = vmatpush2.msra.mxu0 0.0
    %1013 = vmatprep.subr.mxu0 0.0
    %1014 = vmatpush2.msra.mxu0 0.0
    %1015 = vmatprep.subr.mxu0 0.0
    %1016 = vmatpush2.msra.mxu0 0.0
    %1017 = vmatprep.subr.mxu0 0.0
    %1018 = vmatpush2.msra.mxu0 0.0
    %1019 = vmatprep.subr.mxu0 0.0
    %1020 = vmatpush2.msra.mxu0 0.0
    %1021 = vmatprep.subr.mxu0 0.0
    %1022 = vmatpush2.msra.mxu0 0.0
    %1023 = vmatprep.subr.mxu0 0.0
    %1024 = vmatpush2.msra.mxu0 0.0
    %1025 = vmatprep.subr.mxu0 0.0
    %1026 = vmatpush2.msra.mxu0 0.0
    %1027 = vmatprep.subr.mxu0 0.0
    %1028 = vmatpush2.msra.mxu0 0.0
    %1029 = vmatprep.subr.mxu0 0.0
    %1030 = vmatpush2.msra.mxu0 0.0
    %1031 = vmatprep.subr.mxu0 0.0
    %1032 = vmatpush2.msra.mxu0 0.0
    %1033 = vmatprep.subr.mxu0 0.0
    %1034 = vmatpush2.msra.mxu0 0.0
    %1035 = vmatprep.subr.mxu0 0.0
    %1036 = vmatpush2.msra.mxu0 0.0
    %1037 = vmatprep.subr.mxu0 0.0
    %1038 = vmatpush2.msra.mxu0 0.0
    %1039 = vmatprep.subr.mxu0 0.0
    %1040 = vmatpush2.msra.mxu0 0.0
    %1041 = vmatprep.subr.mxu0 0.0
    %1042 = vmatpush2.msra.mxu0 0.0
    %1043 = vmatprep.mubr.f32.mxu0 0.0
    %1044 = vmatmul.mubr.f32.gmra.mxu0 %v968
    %v1045 = vpop.f32.mrf.mxu0
    %v1046 = vadd.f32 0.0, %v1045
    %v1047 = vpop.f32.mrf.mxu0
    %v1048 = vadd.f32 0.0, %v1047
    %1049 = vmatprep.mubr.f32.mxu0 0.0
    %1050 = vmatmul.mubr.f32.gmra.mxu0 %v971
    %v1051 = vpop.f32.mrf.mxu0
    %v1052 = vadd.f32 0.0, %v1051
    %v1053 = vpop.f32.mrf.mxu0
    %v1054 = vadd.f32 0.0, %v1053
    %1055 = vmatprep.mubr.f32.mxu0 0.0
    %1056 = vmatmul.mubr.f32.gmra.mxu0 %v974
    %v1057 = vpop.f32.mrf.mxu0
    %v1058 = vadd.f32 0.0, %v1057
    %v1059 = vpop.f32.mrf.mxu0
    %v1060 = vadd.f32 0.0, %v1059
    %1061 = vmatprep.mubr.f32.mxu0 0.0
    %1062 = vmatmul.mubr.f32.gmra.mxu0 %v977
    %v1063 = vpop.f32.mrf.mxu0
    %v1064 = vadd.f32 0.0, %v1063
    %v1065 = vpop.f32.mrf.mxu0
    %v1066 = vadd.f32 0.0, %v1065
    %1067 = vdwg.mxu0
    %1076 = vrot.lane.b32.xlu0 %v1046, 127
    %v1077 = vpop.permute.xlu0 %1076
    %1078 = vrot.lane.b32.xlu0 %v1048, 127
    %v1079 = vpop.permute.xlu0 %1078
    %1080 = vrot.lane.b32.xlu0 %v1052, 127
    %v1081 = vpop.permute.xlu0 %1080
    %1082 = vrot.lane.b32.xlu0 %v1054, 127
    %v1083 = vpop.permute.xlu0 %1082
    %1084 = vrot.lane.b32.xlu0 %v1058, 127
    %v1085 = vpop.permute.xlu0 %1084
    %1086 = vrot.lane.b32.xlu0 %v1060, 127
    %v1087 = vpop.permute.xlu0 %1086
    %1088 = vrot.lane.b32.xlu0 %v1064, 127
    %v1089 = vpop.permute.xlu0 %1088
    %1090 = vrot.lane.b32.xlu0 %v1066, 127
    %v1091 = vpop.permute.xlu0 %1090
    %vm1092 = vcmask 1039360
    %v1093 = vsel %vm1092, %v1077, %v1079
    %v1094 = vsel %vm1092, %v1081, %v1083
    %v1095 = vsel %vm1092, %v1085, %v1087
    %v1096 = vsel %vm1092, %v1089, %v1091
    %1105 = vrot.lane.b32.xlu0 %v1046, 63
    %v1106 = vpop.permute.xlu0 %1105
    %1107 = vrot.lane.b32.xlu0 %v1052, 63
    %v1108 = vpop.permute.xlu0 %1107
    %1109 = vrot.lane.b32.xlu0 %v1058, 63
    %v1110 = vpop.permute.xlu0 %1109
    %1111 = vrot.lane.b32.xlu0 %v1064, 63
    %v1112 = vpop.permute.xlu0 %1111
    %vm1117 = vcmask 515072
    %v1118 = vsel %vm1117, %v1079, %v1106
    %v1119 = vsel %vm1117, %v1083, %v1108
    %v1120 = vsel %vm1117, %v1087, %v1110
    %v1121 = vsel %vm1117, %v1091, %v1112
    %v1122 = vmax.f32 %v1046, %v1093
    %v1123 = vmax.f32 %v1048, %v1118
    %v1124 = vmax.f32 %v1052, %v1094
    %v1125 = vmax.f32 %v1054, %v1119
    %v1126 = vmax.f32 %v1058, %v1095
    %v1127 = vmax.f32 %v1060, %v1120
    %v1128 = vmax.f32 %v1064, %v1096
    %v1129 = vmax.f32 %v1066, %v1121
    %v1130 = vmax.f32 %v1122, 0.0
    %v1131 = vmax.f32 %v1123, 0.0
    %v1132 = vmax.f32 %v1124, 0.0
    %v1133 = vmax.f32 %v1125, 0.0
    %v1134 = vmax.f32 %v1126, 0.0
    %v1135 = vmax.f32 %v1127, 0.0
    %v1136 = vmax.f32 %v1128, 0.0
    %v1137 = vmax.f32 %v1129, 0.0
    %v1138 = vld [vmem:[%s4] sm:$0xff]
    %v1139 = vld [vmem:[%s4 + $0x8] sm:$0xff]
    %v1140 = vld [vmem:[%s4 + $0x10] sm:$0xff]
    %v1141 = vld [vmem:[%s4 + $0x18] sm:$0xff]
    %v1142 = vld [vmem:[%s4 + $0x20] sm:$0xff]
    %v1143 = vld [vmem:[%s4 + $0x28] sm:$0xff]
    %v1144 = vld [vmem:[%s4 + $0x30] sm:$0xff]
    %v1145 = vld [vmem:[%s4 + $0x38] sm:$0xff]
    %v1146 = vld [vmem:[%s4 + $0x40] sm:$0xff]
    %v1147 = vld [vmem:[%s4 + $0x48] sm:$0xff]
    %v1148 = vld [vmem:[%s4 + $0x50] sm:$0xff]
    %v1149 = vld [vmem:[%s4 + $0x58] sm:$0xff]
    %v1150 = vld [vmem:[%s4 + $0x60] sm:$0xff]
    %v1151 = vld [vmem:[%s4 + $0x68] sm:$0xff]
    %v1152 = vld [vmem:[%s4 + $0x70] sm:$0xff]
    %v1153 = vld [vmem:[%s4 + $0x78] sm:$0xff]
    %v1154 = vld [vmem:[%s4 + $0x80] sm:$0xff]
    %v1155 = vld [vmem:[%s4 + $0x88] sm:$0xff]
    %v1156 = vld [vmem:[%s4 + $0x90] sm:$0xff]
    %v1157 = vld [vmem:[%s4 + $0x98] sm:$0xff]
    %v1158 = vld [vmem:[%s4 + $0xa0] sm:$0xff]
    %v1159 = vld [vmem:[%s4 + $0xa8] sm:$0xff]
    %v1160 = vld [vmem:[%s4 + $0xb0] sm:$0xff]
    %v1161 = vld [vmem:[%s4 + $0xb8] sm:$0xff]
    %v1162 = vld [vmem:[%s4 + $0xc0] sm:$0xff]
    %v1163 = vld [vmem:[%s4 + $0xc8] sm:$0xff]
    %v1164 = vld [vmem:[%s4 + $0xd0] sm:$0xff]
    %v1165 = vld [vmem:[%s4 + $0xd8] sm:$0xff]
    %v1166 = vld [vmem:[%s4 + $0xe0] sm:$0xff]
    %v1167 = vld [vmem:[%s4 + $0xe8] sm:$0xff]
    %v1168 = vld [vmem:[%s4 + $0xf0] sm:$0xff]
    %v1169 = vld [vmem:[%s4 + $0xf8] sm:$0xff]
    %v1170 = vld [vmem:[%s4 + $0x100] sm:$0xff]
    %v1171 = vld [vmem:[%s4 + $0x108] sm:$0xff]
    %v1172 = vld [vmem:[%s4 + $0x110] sm:$0xff]
    %v1173 = vld [vmem:[%s4 + $0x118] sm:$0xff]
    %v1174 = vld [vmem:[%s4 + $0x120] sm:$0xff]
    %v1175 = vld [vmem:[%s4 + $0x128] sm:$0xff]
    %v1176 = vld [vmem:[%s4 + $0x130] sm:$0xff]
    %v1177 = vld [vmem:[%s4 + $0x138] sm:$0xff]
    %v1178 = vld [vmem:[%s4 + $0x140] sm:$0xff]
    %v1179 = vld [vmem:[%s4 + $0x148] sm:$0xff]
    %v1180 = vld [vmem:[%s4 + $0x150] sm:$0xff]
    %v1181 = vld [vmem:[%s4 + $0x158] sm:$0xff]
    %v1182 = vld [vmem:[%s4 + $0x160] sm:$0xff]
    %v1183 = vld [vmem:[%s4 + $0x168] sm:$0xff]
    %v1184 = vld [vmem:[%s4 + $0x170] sm:$0xff]
    %v1185 = vld [vmem:[%s4 + $0x178] sm:$0xff]
    %1194 = vrot.lane.b32.xlu0 %v1130, 126
    %v1195 = vpop.permute.xlu0 %1194
    %1196 = vrot.lane.b32.xlu0 %v1131, 126
    %v1197 = vpop.permute.xlu0 %1196
    %1198 = vrot.lane.b32.xlu0 %v1132, 126
    %v1199 = vpop.permute.xlu0 %1198
    %1200 = vrot.lane.b32.xlu0 %v1133, 126
    %v1201 = vpop.permute.xlu0 %1200
    %1202 = vrot.lane.b32.xlu0 %v1134, 126
    %v1203 = vpop.permute.xlu0 %1202
    %1204 = vrot.lane.b32.xlu0 %v1135, 126
    %v1205 = vpop.permute.xlu0 %1204
    %1206 = vrot.lane.b32.xlu0 %v1136, 126
    %v1207 = vpop.permute.xlu0 %1206
    %1208 = vrot.lane.b32.xlu0 %v1137, 126
    %v1209 = vpop.permute.xlu0 %1208
    %vm1210 = vcmask 1031168
    %v1211 = vsel %vm1210, %v1195, %v1197
    %v1212 = vsel %vm1210, %v1199, %v1201
    %v1213 = vsel %vm1210, %v1203, %v1205
    %v1214 = vsel %vm1210, %v1207, %v1209
    %1223 = vrot.lane.b32.xlu0 %v1130, 62
    %v1224 = vpop.permute.xlu0 %1223
    %1225 = vrot.lane.b32.xlu0 %v1132, 62
    %v1226 = vpop.permute.xlu0 %1225
    %1227 = vrot.lane.b32.xlu0 %v1134, 62
    %v1228 = vpop.permute.xlu0 %1227
    %1229 = vrot.lane.b32.xlu0 %v1136, 62
    %v1230 = vpop.permute.xlu0 %1229
    %vm1235 = vcmask 506880
    %v1236 = vsel %vm1235, %v1197, %v1224
    %v1237 = vsel %vm1235, %v1201, %v1226
    %v1238 = vsel %vm1235, %v1205, %v1228
    %v1239 = vsel %vm1235, %v1209, %v1230
    %s1240 = scalar_lea.vmem %s4, 384
    %v1241 = vld [vmem:[%s1240] sm:$0xff]
    %v1242 = vld [vmem:[%s1240 + $0x8] sm:$0xff]
    %v1243 = vld [vmem:[%s1240 + $0x10] sm:$0xff]
    %v1244 = vld [vmem:[%s1240 + $0x18] sm:$0xff]
    %v1245 = vld [vmem:[%s1240 + $0x20] sm:$0xff]
    %v1246 = vld [vmem:[%s1240 + $0x28] sm:$0xff]
    %v1247 = vld [vmem:[%s1240 + $0x30] sm:$0xff]
    %v1248 = vld [vmem:[%s1240 + $0x38] sm:$0xff]
    %v1249 = vld [vmem:[%s1240 + $0x40] sm:$0xff]
    %v1250 = vld [vmem:[%s1240 + $0x48] sm:$0xff]
    %v1251 = vld [vmem:[%s1240 + $0x50] sm:$0xff]
    %v1252 = vld [vmem:[%s1240 + $0x58] sm:$0xff]
    %v1253 = vld [vmem:[%s1240 + $0x60] sm:$0xff]
    %v1254 = vld [vmem:[%s1240 + $0x68] sm:$0xff]
    %v1255 = vld [vmem:[%s1240 + $0x70] sm:$0xff]
    %v1256 = vld [vmem:[%s1240 + $0x78] sm:$0xff]
    %v1257 = vld [vmem:[%s1240 + $0x80] sm:$0xff]
    %v1258 = vld [vmem:[%s1240 + $0x88] sm:$0xff]
    %v1259 = vld [vmem:[%s1240 + $0x90] sm:$0xff]
    %v1260 = vld [vmem:[%s1240 + $0x98] sm:$0xff]
    %v1261 = vld [vmem:[%s1240 + $0xa0] sm:$0xff]
    %v1262 = vld [vmem:[%s1240 + $0xa8] sm:$0xff]
    %v1263 = vld [vmem:[%s1240 + $0xb0] sm:$0xff]
    %v1264 = vld [vmem:[%s1240 + $0xb8] sm:$0xff]
    %v1265 = vld [vmem:[%s1240 + $0xc0] sm:$0xff]
    %v1266 = vld [vmem:[%s1240 + $0xc8] sm:$0xff]
    %v1267 = vld [vmem:[%s1240 + $0xd0] sm:$0xff]
    %v1268 = vld [vmem:[%s1240 + $0xd8] sm:$0xff]
    %v1269 = vld [vmem:[%s1240 + $0xe0] sm:$0xff]
    %v1270 = vld [vmem:[%s1240 + $0xe8] sm:$0xff]
    %v1271 = vld [vmem:[%s1240 + $0xf0] sm:$0xff]
    %v1272 = vld [vmem:[%s1240 + $0xf8] sm:$0xff]
    %v1273 = vld [vmem:[%s1240 + $0x100] sm:$0xff]
    %v1274 = vld [vmem:[%s1240 + $0x108] sm:$0xff]
    %v1275 = vld [vmem:[%s1240 + $0x110] sm:$0xff]
    %v1276 = vld [vmem:[%s1240 + $0x118] sm:$0xff]
    %v1277 = vld [vmem:[%s1240 + $0x120] sm:$0xff]
    %v1278 = vld [vmem:[%s1240 + $0x128] sm:$0xff]
    %v1279 = vld [vmem:[%s1240 + $0x130] sm:$0xff]
    %v1280 = vld [vmem:[%s1240 + $0x138] sm:$0xff]
    %v1281 = vld [vmem:[%s1240 + $0x140] sm:$0xff]
    %v1282 = vld [vmem:[%s1240 + $0x148] sm:$0xff]
    %v1283 = vld [vmem:[%s1240 + $0x150] sm:$0xff]
    %v1284 = vld [vmem:[%s1240 + $0x158] sm:$0xff]
    %v1285 = vld [vmem:[%s1240 + $0x160] sm:$0xff]
    %v1286 = vld [vmem:[%s1240 + $0x168] sm:$0xff]
    %v1287 = vld [vmem:[%s1240 + $0x170] sm:$0xff]
    %v1288 = vld [vmem:[%s1240 + $0x178] sm:$0xff]
    %v1290 = vsel %vm966, %v1236, 0
    %v1293 = vsel %vm966, %v1237, 0
    %v1296 = vsel %vm966, %v1238, 0
    %v1299 = vsel %vm966, %v1239, 0
    %1301 = vmatprep.subr.mxu0 %v1272
    %1302 = vmatpush1.msra.mxu0 %v1271
    %1303 = vmatprep.subr.mxu0 %v1270
    %1304 = vmatpush1.msra.mxu0 %v1269
    %1305 = vmatprep.subr.mxu0 %v1268
    %1306 = vmatpush1.msra.mxu0 %v1267
    %1307 = vmatprep.subr.mxu0 %v1266
    %1308 = vmatpush1.msra.mxu0 %v1265
    %1309 = vmatprep.subr.mxu0 %v1264
    %1310 = vmatpush1.msra.mxu0 %v1263
    %1311 = vmatprep.subr.mxu0 %v1262
    %1312 = vmatpush1.msra.mxu0 %v1261
    %1313 = vmatprep.subr.mxu0 %v1260
    %1314 = vmatpush1.msra.mxu0 %v1259
    %1315 = vmatprep.subr.mxu0 %v1258
    %1316 = vmatpush1.msra.mxu0 %v1257
    %1317 = vmatprep.subr.mxu0 %v1256
    %1318 = vmatpush1.msra.mxu0 %v1255
    %1319 = vmatprep.subr.mxu0 %v1254
    %1320 = vmatpush1.msra.mxu0 %v1253
    %1321 = vmatprep.subr.mxu0 %v1252
    %1322 = vmatpush1.msra.mxu0 %v1251
    %1323 = vmatprep.subr.mxu0 %v1250
    %1324 = vmatpush1.msra.mxu0 %v1249
    %1325 = vmatprep.subr.mxu0 %v1248
    %1326 = vmatpush1.msra.mxu0 %v1247
    %1327 = vmatprep.subr.mxu0 %v1246
    %1328 = vmatpush1.msra.mxu0 %v1245
    %1329 = vmatprep.subr.mxu0 %v1244
    %1330 = vmatpush1.msra.mxu0 %v1243
    %1331 = vmatprep.subr.mxu0 %v1242
    %1332 = vmatpush1.msra.mxu0 %v1241
    %1333 = vmatprep.subr.mxu0 0.0
    %1334 = vmatpush2.msra.mxu0 0.0
    %1335 = vmatprep.subr.mxu0 0.0
    %1336 = vmatpush2.msra.mxu0 0.0
    %1337 = vmatprep.subr.mxu0 0.0
    %1338 = vmatpush2.msra.mxu0 0.0
    %1339 = vmatprep.subr.mxu0 0.0
    %1340 = vmatpush2.msra.mxu0 0.0
    %1341 = vmatprep.subr.mxu0 0.0
    %1342 = vmatpush2.msra.mxu0 0.0
    %1343 = vmatprep.subr.mxu0 0.0
    %1344 = vmatpush2.msra.mxu0 0.0
    %1345 = vmatprep.subr.mxu0 0.0
    %1346 = vmatpush2.msra.mxu0 0.0
    %1347 = vmatprep.subr.mxu0 0.0
    %1348 = vmatpush2.msra.mxu0 0.0
    %1349 = vmatprep.subr.mxu0 %v1288
    %1350 = vmatpush2.msra.mxu0 %v1287
    %1351 = vmatprep.subr.mxu0 %v1286
    %1352 = vmatpush2.msra.mxu0 %v1285
    %1353 = vmatprep.subr.mxu0 %v1284
    %1354 = vmatpush2.msra.mxu0 %v1283
    %1355 = vmatprep.subr.mxu0 %v1282
    %1356 = vmatpush2.msra.mxu0 %v1281
    %1357 = vmatprep.subr.mxu0 %v1280
    %1358 = vmatpush2.msra.mxu0 %v1279
    %1359 = vmatprep.subr.mxu0 %v1278
    %1360 = vmatpush2.msra.mxu0 %v1277
    %1361 = vmatprep.subr.mxu0 %v1276
    %1362 = vmatpush2.msra.mxu0 %v1275
    %1363 = vmatprep.subr.mxu0 %v1274
    %1364 = vmatpush2.msra.mxu0 %v1273
    %1365 = vmatprep.mubr.f32.mxu0 %v1290
    %1366 = vmatmul.mubr.f32.gmra.mxu0 %v1211
    %v1367 = vpop.f32.mrf.mxu0
    %v1368 = vadd.f32 0.0, %v1367
    %v1369 = vpop.f32.mrf.mxu0
    %v1370 = vadd.f32 0.0, %v1369
    %1371 = vmatprep.mubr.f32.mxu0 %v1293
    %1372 = vmatmul.mubr.f32.gmra.mxu0 %v1212
    %v1373 = vpop.f32.mrf.mxu0
    %v1374 = vadd.f32 0.0, %v1373
    %v1375 = vpop.f32.mrf.mxu0
    %v1376 = vadd.f32 0.0, %v1375
    %1377 = vmatprep.mubr.f32.mxu0 %v1296
    %1378 = vmatmul.mubr.f32.gmra.mxu0 %v1213
    %v1379 = vpop.f32.mrf.mxu0
    %v1380 = vadd.f32 0.0, %v1379
    %v1381 = vpop.f32.mrf.mxu0
    %v1382 = vadd.f32 0.0, %v1381
    %1383 = vmatprep.mubr.f32.mxu0 %v1299
    %1384 = vmatmul.mubr.f32.gmra.mxu0 %v1214
    %v1385 = vpop.f32.mrf.mxu0
    %v1386 = vadd.f32 0.0, %v1385
    %v1387 = vpop.f32.mrf.mxu0
    %v1388 = vadd.f32 0.0, %v1387
    %1389 = vdwg.mxu0
    %v1390 = vsel %vm966, %v1131, 0
    %v1392 = vsel %vm966, %v1133, 0
    %v1394 = vsel %vm966, %v1135, 0
    %v1396 = vsel %vm966, %v1137, 0
    %1398 = vmatprep.subr.mxu0 %v1169
    %1399 = vmatpush1.msra.mxu0 %v1168
    %1400 = vmatprep.subr.mxu0 %v1167
    %1401 = vmatpush1.msra.mxu0 %v1166
    %1402 = vmatprep.subr.mxu0 %v1165
    %1403 = vmatpush1.msra.mxu0 %v1164
    %1404 = vmatprep.subr.mxu0 %v1163
    %1405 = vmatpush1.msra.mxu0 %v1162
    %1406 = vmatprep.subr.mxu0 %v1161
    %1407 = vmatpush1.msra.mxu0 %v1160
    %1408 = vmatprep.subr.mxu0 %v1159
    %1409 = vmatpush1.msra.mxu0 %v1158
    %1410 = vmatprep.subr.mxu0 %v1157
    %1411 = vmatpush1.msra.mxu0 %v1156
    %1412 = vmatprep.subr.mxu0 %v1155
    %1413 = vmatpush1.msra.mxu0 %v1154
    %1414 = vmatprep.subr.mxu0 %v1153
    %1415 = vmatpush1.msra.mxu0 %v1152
    %1416 = vmatprep.subr.mxu0 %v1151
    %1417 = vmatpush1.msra.mxu0 %v1150
    %1418 = vmatprep.subr.mxu0 %v1149
    %1419 = vmatpush1.msra.mxu0 %v1148
    %1420 = vmatprep.subr.mxu0 %v1147
    %1421 = vmatpush1.msra.mxu0 %v1146
    %1422 = vmatprep.subr.mxu0 %v1145
    %1423 = vmatpush1.msra.mxu0 %v1144
    %1424 = vmatprep.subr.mxu0 %v1143
    %1425 = vmatpush1.msra.mxu0 %v1142
    %1426 = vmatprep.subr.mxu0 %v1141
    %1427 = vmatpush1.msra.mxu0 %v1140
    %1428 = vmatprep.subr.mxu0 %v1139
    %1429 = vmatpush1.msra.mxu0 %v1138
    %1430 = vmatprep.subr.mxu0 0.0
    %1431 = vmatpush2.msra.mxu0 0.0
    %1432 = vmatprep.subr.mxu0 0.0
    %1433 = vmatpush2.msra.mxu0 0.0
    %1434 = vmatprep.subr.mxu0 0.0
    %1435 = vmatpush2.msra.mxu0 0.0
    %1436 = vmatprep.subr.mxu0 0.0
    %1437 = vmatpush2.msra.mxu0 0.0
    %1438 = vmatprep.subr.mxu0 0.0
    %1439 = vmatpush2.msra.mxu0 0.0
    %1440 = vmatprep.subr.mxu0 0.0
    %1441 = vmatpush2.msra.mxu0 0.0
    %1442 = vmatprep.subr.mxu0 0.0
    %1443 = vmatpush2.msra.mxu0 0.0
    %1444 = vmatprep.subr.mxu0 0.0
    %1445 = vmatpush2.msra.mxu0 0.0
    %1446 = vmatprep.subr.mxu0 %v1185
    %1447 = vmatpush2.msra.mxu0 %v1184
    %1448 = vmatprep.subr.mxu0 %v1183
    %1449 = vmatpush2.msra.mxu0 %v1182
    %1450 = vmatprep.subr.mxu0 %v1181
    %1451 = vmatpush2.msra.mxu0 %v1180
    %1452 = vmatprep.subr.mxu0 %v1179
    %1453 = vmatpush2.msra.mxu0 %v1178
    %1454 = vmatprep.subr.mxu0 %v1177
    %1455 = vmatpush2.msra.mxu0 %v1176
    %1456 = vmatprep.subr.mxu0 %v1175
    %1457 = vmatpush2.msra.mxu0 %v1174
    %1458 = vmatprep.subr.mxu0 %v1173
    %1459 = vmatpush2.msra.mxu0 %v1172
    %1460 = vmatprep.subr.mxu0 %v1171
    %1461 = vmatpush2.msra.mxu0 %v1170
    %1462 = vmatprep.mubr.f32.mxu0 %v1390
    %1463 = vmatmul.mubr.f32.gmra.mxu0 %v1130
    %v1464 = vpop.f32.mrf.mxu0
    %v1465 = vadd.f32 %v1368, %v1464
    %v1466 = vpop.f32.mrf.mxu0
    %v1467 = vadd.f32 %v1370, %v1466
    %1468 = vmatprep.mubr.f32.mxu0 %v1392
    %1469 = vmatmul.mubr.f32.gmra.mxu0 %v1132
    %v1470 = vpop.f32.mrf.mxu0
    %v1471 = vadd.f32 %v1374, %v1470
    %v1472 = vpop.f32.mrf.mxu0
    %v1473 = vadd.f32 %v1376, %v1472
    %1474 = vmatprep.mubr.f32.mxu0 %v1394
    %1475 = vmatmul.mubr.f32.gmra.mxu0 %v1134
    %v1476 = vpop.f32.mrf.mxu0
    %v1477 = vadd.f32 %v1380, %v1476
    %v1478 = vpop.f32.mrf.mxu0
    %v1479 = vadd.f32 %v1382, %v1478
    %1480 = vmatprep.mubr.f32.mxu0 %v1396
    %1481 = vmatmul.mubr.f32.gmra.mxu0 %v1136
    %v1482 = vpop.f32.mrf.mxu0
    %v1483 = vadd.f32 %v1386, %v1482
    %v1484 = vpop.f32.mrf.mxu0
    %v1485 = vadd.f32 %v1388, %v1484
    %1486 = vdwg.mxu0
    %v1487 = vrot.slane %v1130, 1
    %v1488 = vrot.slane %v1132, 1
    %v1489 = vsel %vm428, %v1487, %v1488
    %v1490 = vrot.slane %v1131, 1
    %v1491 = vrot.slane %v1133, 1
    %v1492 = vsel %vm428, %v1490, %v1491
    %v1493 = vrot.slane %v1134, 1
    %v1494 = vsel %vm428, %v1488, %v1493
    %v1495 = vrot.slane %v1135, 1
    %v1496 = vsel %vm428, %v1491, %v1495
    %v1497 = vrot.slane %v1136, 1
    %v1498 = vsel %vm428, %v1493, %v1497
    %v1499 = vrot.slane %v1137, 1
    %v1500 = vsel %vm428, %v1495, %v1499
    %v1508 = vsel %vm428, %v1497, %v1487
    %v1509 = vsel %vm428, %v1499, %v1490
    %s1510 = scalar_lea.vmem %s4, 768
    %v1511 = vld [vmem:[%s1510] sm:$0xff]
    %v1512 = vld [vmem:[%s1510 + $0x8] sm:$0xff]
    %v1513 = vld [vmem:[%s1510 + $0x10] sm:$0xff]
    %v1514 = vld [vmem:[%s1510 + $0x18] sm:$0xff]
    %v1515 = vld [vmem:[%s1510 + $0x20] sm:$0xff]
    %v1516 = vld [vmem:[%s1510 + $0x28] sm:$0xff]
    %v1517 = vld [vmem:[%s1510 + $0x30] sm:$0xff]
    %v1518 = vld [vmem:[%s1510 + $0x38] sm:$0xff]
    %v1519 = vld [vmem:[%s1510 + $0x40] sm:$0xff]
    %v1520 = vld [vmem:[%s1510 + $0x48] sm:$0xff]
    %v1521 = vld [vmem:[%s1510 + $0x50] sm:$0xff]
    %v1522 = vld [vmem:[%s1510 + $0x58] sm:$0xff]
    %v1523 = vld [vmem:[%s1510 + $0x60] sm:$0xff]
    %v1524 = vld [vmem:[%s1510 + $0x68] sm:$0xff]
    %v1525 = vld [vmem:[%s1510 + $0x70] sm:$0xff]
    %v1526 = vld [vmem:[%s1510 + $0x78] sm:$0xff]
    %v1527 = vld [vmem:[%s1510 + $0x80] sm:$0xff]
    %v1528 = vld [vmem:[%s1510 + $0x88] sm:$0xff]
    %v1529 = vld [vmem:[%s1510 + $0x90] sm:$0xff]
    %v1530 = vld [vmem:[%s1510 + $0x98] sm:$0xff]
    %v1531 = vld [vmem:[%s1510 + $0xa0] sm:$0xff]
    %v1532 = vld [vmem:[%s1510 + $0xa8] sm:$0xff]
    %v1533 = vld [vmem:[%s1510 + $0xb0] sm:$0xff]
    %v1534 = vld [vmem:[%s1510 + $0xb8] sm:$0xff]
    %v1535 = vld [vmem:[%s1510 + $0xc0] sm:$0xff]
    %v1536 = vld [vmem:[%s1510 + $0xc8] sm:$0xff]
    %v1537 = vld [vmem:[%s1510 + $0xd0] sm:$0xff]
    %v1538 = vld [vmem:[%s1510 + $0xd8] sm:$0xff]
    %v1539 = vld [vmem:[%s1510 + $0xe0] sm:$0xff]
    %v1540 = vld [vmem:[%s1510 + $0xe8] sm:$0xff]
    %v1541 = vld [vmem:[%s1510 + $0xf0] sm:$0xff]
    %v1542 = vld [vmem:[%s1510 + $0xf8] sm:$0xff]
    %v1543 = vld [vmem:[%s1510 + $0x100] sm:$0xff]
    %v1544 = vld [vmem:[%s1510 + $0x108] sm:$0xff]
    %v1545 = vld [vmem:[%s1510 + $0x110] sm:$0xff]
    %v1546 = vld [vmem:[%s1510 + $0x118] sm:$0xff]
    %v1547 = vld [vmem:[%s1510 + $0x120] sm:$0xff]
    %v1548 = vld [vmem:[%s1510 + $0x128] sm:$0xff]
    %v1549 = vld [vmem:[%s1510 + $0x130] sm:$0xff]
    %v1550 = vld [vmem:[%s1510 + $0x138] sm:$0xff]
    %v1551 = vld [vmem:[%s1510 + $0x140] sm:$0xff]
    %v1552 = vld [vmem:[%s1510 + $0x148] sm:$0xff]
    %v1553 = vld [vmem:[%s1510 + $0x150] sm:$0xff]
    %v1554 = vld [vmem:[%s1510 + $0x158] sm:$0xff]
    %v1555 = vld [vmem:[%s1510 + $0x160] sm:$0xff]
    %v1556 = vld [vmem:[%s1510 + $0x168] sm:$0xff]
    %v1557 = vld [vmem:[%s1510 + $0x170] sm:$0xff]
    %v1558 = vld [vmem:[%s1510 + $0x178] sm:$0xff]
    %v1559 = vsel %vm966, %v1492, 0
    %v1561 = vsel %vm966, %v1496, 0
    %v1563 = vsel %vm966, %v1500, 0
    %v1566 = vsel %vm966, %v1509, 0
    %1568 = vmatprep.subr.mxu0 %v1542
    %1569 = vmatpush1.msra.mxu0 %v1541
    %1570 = vmatprep.subr.mxu0 %v1540
    %1571 = vmatpush1.msra.mxu0 %v1539
    %1572 = vmatprep.subr.mxu0 %v1538
    %1573 = vmatpush1.msra.mxu0 %v1537
    %1574 = vmatprep.subr.mxu0 %v1536
    %1575 = vmatpush1.msra.mxu0 %v1535
    %1576 = vmatprep.subr.mxu0 %v1534
    %1577 = vmatpush1.msra.mxu0 %v1533
    %1578 = vmatprep.subr.mxu0 %v1532
    %1579 = vmatpush1.msra.mxu0 %v1531
    %1580 = vmatprep.subr.mxu0 %v1530
    %1581 = vmatpush1.msra.mxu0 %v1529
    %1582 = vmatprep.subr.mxu0 %v1528
    %1583 = vmatpush1.msra.mxu0 %v1527
    %1584 = vmatprep.subr.mxu0 %v1526
    %1585 = vmatpush1.msra.mxu0 %v1525
    %1586 = vmatprep.subr.mxu0 %v1524
    %1587 = vmatpush1.msra.mxu0 %v1523
    %1588 = vmatprep.subr.mxu0 %v1522
    %1589 = vmatpush1.msra.mxu0 %v1521
    %1590 = vmatprep.subr.mxu0 %v1520
    %1591 = vmatpush1.msra.mxu0 %v1519
    %1592 = vmatprep.subr.mxu0 %v1518
    %1593 = vmatpush1.msra.mxu0 %v1517
    %1594 = vmatprep.subr.mxu0 %v1516
    %1595 = vmatpush1.msra.mxu0 %v1515
    %1596 = vmatprep.subr.mxu0 %v1514
    %1597 = vmatpush1.msra.mxu0 %v1513
    %1598 = vmatprep.subr.mxu0 %v1512
    %1599 = vmatpush1.msra.mxu0 %v1511
    %1600 = vmatprep.subr.mxu0 0.0
    %1601 = vmatpush2.msra.mxu0 0.0
    %1602 = vmatprep.subr.mxu0 0.0
    %1603 = vmatpush2.msra.mxu0 0.0
    %1604 = vmatprep.subr.mxu0 0.0
    %1605 = vmatpush2.msra.mxu0 0.0
    %1606 = vmatprep.subr.mxu0 0.0
    %1607 = vmatpush2.msra.mxu0 0.0
    %1608 = vmatprep.subr.mxu0 0.0
    %1609 = vmatpush2.msra.mxu0 0.0
    %1610 = vmatprep.subr.mxu0 0.0
    %1611 = vmatpush2.msra.mxu0 0.0
    %1612 = vmatprep.subr.mxu0 0.0
    %1613 = vmatpush2.msra.mxu0 0.0
    %1614 = vmatprep.subr.mxu0 0.0
    %1615 = vmatpush2.msra.mxu0 0.0
    %1616 = vmatprep.subr.mxu0 %v1558
    %1617 = vmatpush2.msra.mxu0 %v1557
    %1618 = vmatprep.subr.mxu0 %v1556
    %1619 = vmatpush2.msra.mxu0 %v1555
    %1620 = vmatprep.subr.mxu0 %v1554
    %1621 = vmatpush2.msra.mxu0 %v1553
    %1622 = vmatprep.subr.mxu0 %v1552
    %1623 = vmatpush2.msra.mxu0 %v1551
    %1624 = vmatprep.subr.mxu0 %v1550
    %1625 = vmatpush2.msra.mxu0 %v1549
    %1626 = vmatprep.subr.mxu0 %v1548
    %1627 = vmatpush2.msra.mxu0 %v1547
    %1628 = vmatprep.subr.mxu0 %v1546
    %1629 = vmatpush2.msra.mxu0 %v1545
    %1630 = vmatprep.subr.mxu0 %v1544
    %1631 = vmatpush2.msra.mxu0 %v1543
    %1632 = vmatprep.mubr.f32.mxu0 %v1559
    %1633 = vmatmul.mubr.f32.gmra.mxu0 %v1489
    %v1634 = vpop.f32.mrf.mxu0
    %v1635 = vadd.f32 0.0, %v1634
    %v1636 = vpop.f32.mrf.mxu0
    %v1637 = vadd.f32 0.0, %v1636
    %1638 = vmatprep.mubr.f32.mxu0 %v1561
    %1639 = vmatmul.mubr.f32.gmra.mxu0 %v1494
    %v1640 = vpop.f32.mrf.mxu0
    %v1641 = vadd.f32 0.0, %v1640
    %v1642 = vpop.f32.mrf.mxu0
    %v1643 = vadd.f32 0.0, %v1642
    %1644 = vmatprep.mubr.f32.mxu0 %v1563
    %1645 = vmatmul.mubr.f32.gmra.mxu0 %v1498
    %v1646 = vpop.f32.mrf.mxu0
    %v1647 = vadd.f32 0.0, %v1646
    %v1648 = vpop.f32.mrf.mxu0
    %v1649 = vadd.f32 0.0, %v1648
    %1650 = vmatprep.mubr.f32.mxu0 %v1566
    %1651 = vmatmul.mubr.f32.gmra.mxu0 %v1508
    %v1652 = vpop.f32.mrf.mxu0
    %v1653 = vadd.f32 0.0, %v1652
    %v1654 = vpop.f32.mrf.mxu0
    %v1655 = vadd.f32 0.0, %v1654
    %1656 = vdwg.mxu0
    %v1657 = vadd.f32 %v1465, %v1635
    %v1658 = vadd.f32 %v1467, %v1637
    %v1659 = vadd.f32 %v1471, %v1641
    %v1660 = vadd.f32 %v1473, %v1643
    %v1661 = vadd.f32 %v1477, %v1647
    %v1662 = vadd.f32 %v1479, %v1649
    %v1663 = vadd.f32 %v1483, %v1653
    %v1664 = vadd.f32 %v1485, %v1655
    %1666 = vrot.lane.b32.xlu0 %v1489, 126
    %v1667 = vpop.permute.xlu0 %1666
    %1668 = vrot.lane.b32.xlu0 %v1492, 126
    %v1669 = vpop.permute.xlu0 %1668
    %1670 = vrot.lane.b32.xlu0 %v1494, 126
    %v1671 = vpop.permute.xlu0 %1670
    %1672 = vrot.lane.b32.xlu0 %v1496, 126
    %v1673 = vpop.permute.xlu0 %1672
    %1674 = vrot.lane.b32.xlu0 %v1498, 126
    %v1675 = vpop.permute.xlu0 %1674
    %1676 = vrot.lane.b32.xlu0 %v1500, 126
    %v1677 = vpop.permute.xlu0 %1676
    %1678 = vrot.lane.b32.xlu0 %v1508, 126
    %v1679 = vpop.permute.xlu0 %1678
    %1680 = vrot.lane.b32.xlu0 %v1509, 126
    %v1681 = vpop.permute.xlu0 %1680
    %v1682 = vsel %vm1210, %v1667, %v1669
    %v1683 = vsel %vm1210, %v1671, %v1673
    %v1684 = vsel %vm1210, %v1675, %v1677
    %v1685 = vsel %vm1210, %v1679, %v1681
    %1694 = vrot.lane.b32.xlu0 %v1489, 62
    %v1695 = vpop.permute.xlu0 %1694
    %1696 = vrot.lane.b32.xlu0 %v1494, 62
    %v1697 = vpop.permute.xlu0 %1696
    %1698 = vrot.lane.b32.xlu0 %v1498, 62
    %v1699 = vpop.permute.xlu0 %1698
    %1700 = vrot.lane.b32.xlu0 %v1508, 62
    %v1701 = vpop.permute.xlu0 %1700
    %v1706 = vsel %vm1235, %v1669, %v1695
    %v1707 = vsel %vm1235, %v1673, %v1697
    %v1708 = vsel %vm1235, %v1677, %v1699
    %v1709 = vsel %vm1235, %v1681, %v1701
    %s1710 = scalar_lea.vmem %s4, 1152
    %v1711 = vld [vmem:[%s1710] sm:$0xff]
    %v1712 = vld [vmem:[%s1710 + $0x8] sm:$0xff]
    %v1713 = vld [vmem:[%s1710 + $0x10] sm:$0xff]
    %v1714 = vld [vmem:[%s1710 + $0x18] sm:$0xff]
    %v1715 = vld [vmem:[%s1710 + $0x20] sm:$0xff]
    %v1716 = vld [vmem:[%s1710 + $0x28] sm:$0xff]
    %v1717 = vld [vmem:[%s1710 + $0x30] sm:$0xff]
    %v1718 = vld [vmem:[%s1710 + $0x38] sm:$0xff]
    %v1719 = vld [vmem:[%s1710 + $0x40] sm:$0xff]
    %v1720 = vld [vmem:[%s1710 + $0x48] sm:$0xff]
    %v1721 = vld [vmem:[%s1710 + $0x50] sm:$0xff]
    %v1722 = vld [vmem:[%s1710 + $0x58] sm:$0xff]
    %v1723 = vld [vmem:[%s1710 + $0x60] sm:$0xff]
    %v1724 = vld [vmem:[%s1710 + $0x68] sm:$0xff]
    %v1725 = vld [vmem:[%s1710 + $0x70] sm:$0xff]
    %v1726 = vld [vmem:[%s1710 + $0x78] sm:$0xff]
    %v1727 = vld [vmem:[%s1710 + $0x80] sm:$0xff]
    %v1728 = vld [vmem:[%s1710 + $0x88] sm:$0xff]
    %v1729 = vld [vmem:[%s1710 + $0x90] sm:$0xff]
    %v1730 = vld [vmem:[%s1710 + $0x98] sm:$0xff]
    %v1731 = vld [vmem:[%s1710 + $0xa0] sm:$0xff]
    %v1732 = vld [vmem:[%s1710 + $0xa8] sm:$0xff]
    %v1733 = vld [vmem:[%s1710 + $0xb0] sm:$0xff]
    %v1734 = vld [vmem:[%s1710 + $0xb8] sm:$0xff]
    %v1735 = vld [vmem:[%s1710 + $0xc0] sm:$0xff]
    %v1736 = vld [vmem:[%s1710 + $0xc8] sm:$0xff]
    %v1737 = vld [vmem:[%s1710 + $0xd0] sm:$0xff]
    %v1738 = vld [vmem:[%s1710 + $0xd8] sm:$0xff]
    %v1739 = vld [vmem:[%s1710 + $0xe0] sm:$0xff]
    %v1740 = vld [vmem:[%s1710 + $0xe8] sm:$0xff]
    %v1741 = vld [vmem:[%s1710 + $0xf0] sm:$0xff]
    %v1742 = vld [vmem:[%s1710 + $0xf8] sm:$0xff]
    %v1743 = vld [vmem:[%s1710 + $0x100] sm:$0xff]
    %v1744 = vld [vmem:[%s1710 + $0x108] sm:$0xff]
    %v1745 = vld [vmem:[%s1710 + $0x110] sm:$0xff]
    %v1746 = vld [vmem:[%s1710 + $0x118] sm:$0xff]
    %v1747 = vld [vmem:[%s1710 + $0x120] sm:$0xff]
    %v1748 = vld [vmem:[%s1710 + $0x128] sm:$0xff]
    %v1749 = vld [vmem:[%s1710 + $0x130] sm:$0xff]
    %v1750 = vld [vmem:[%s1710 + $0x138] sm:$0xff]
    %v1751 = vld [vmem:[%s1710 + $0x140] sm:$0xff]
    %v1752 = vld [vmem:[%s1710 + $0x148] sm:$0xff]
    %v1753 = vld [vmem:[%s1710 + $0x150] sm:$0xff]
    %v1754 = vld [vmem:[%s1710 + $0x158] sm:$0xff]
    %v1755 = vld [vmem:[%s1710 + $0x160] sm:$0xff]
    %v1756 = vld [vmem:[%s1710 + $0x168] sm:$0xff]
    %v1757 = vld [vmem:[%s1710 + $0x170] sm:$0xff]
    %v1758 = vld [vmem:[%s1710 + $0x178] sm:$0xff]
    %v1760 = vsel %vm966, %v1706, 0
    %v1763 = vsel %vm966, %v1707, 0
    %v1766 = vsel %vm966, %v1708, 0
    %v1769 = vsel %vm966, %v1709, 0
    %1771 = vmatprep.subr.mxu0 %v1742
    %1772 = vmatpush1.msra.mxu0 %v1741
    %1773 = vmatprep.subr.mxu0 %v1740
    %1774 = vmatpush1.msra.mxu0 %v1739
    %1775 = vmatprep.subr.mxu0 %v1738
    %1776 = vmatpush1.msra.mxu0 %v1737
    %1777 = vmatprep.subr.mxu0 %v1736
    %1778 = vmatpush1.msra.mxu0 %v1735
    %1779 = vmatprep.subr.mxu0 %v1734
    %1780 = vmatpush1.msra.mxu0 %v1733
    %1781 = vmatprep.subr.mxu0 %v1732
    %1782 = vmatpush1.msra.mxu0 %v1731
    %1783 = vmatprep.subr.mxu0 %v1730
    %1784 = vmatpush1.msra.mxu0 %v1729
    %1785 = vmatprep.subr.mxu0 %v1728
    %1786 = vmatpush1.msra.mxu0 %v1727
    %1787 = vmatprep.subr.mxu0 %v1726
    %1788 = vmatpush1.msra.mxu0 %v1725
    %1789 = vmatprep.subr.mxu0 %v1724
    %1790 = vmatpush1.msra.mxu0 %v1723
    %1791 = vmatprep.subr.mxu0 %v1722
    %1792 = vmatpush1.msra.mxu0 %v1721
    %1793 = vmatprep.subr.mxu0 %v1720
    %1794 = vmatpush1.msra.mxu0 %v1719
    %1795 = vmatprep.subr.mxu0 %v1718
    %1796 = vmatpush1.msra.mxu0 %v1717
    %1797 = vmatprep.subr.mxu0 %v1716
    %1798 = vmatpush1.msra.mxu0 %v1715
    %1799 = vmatprep.subr.mxu0 %v1714
    %1800 = vmatpush1.msra.mxu0 %v1713
    %1801 = vmatprep.subr.mxu0 %v1712
    %1802 = vmatpush1.msra.mxu0 %v1711
    %1803 = vmatprep.subr.mxu0 0.0
    %1804 = vmatpush2.msra.mxu0 0.0
    %1805 = vmatprep.subr.mxu0 0.0
    %1806 = vmatpush2.msra.mxu0 0.0
    %1807 = vmatprep.subr.mxu0 0.0
    %1808 = vmatpush2.msra.mxu0 0.0
    %1809 = vmatprep.subr.mxu0 0.0
    %1810 = vmatpush2.msra.mxu0 0.0
    %1811 = vmatprep.subr.mxu0 0.0
    %1812 = vmatpush2.msra.mxu0 0.0
    %1813 = vmatprep.subr.mxu0 0.0
    %1814 = vmatpush2.msra.mxu0 0.0
    %1815 = vmatprep.subr.mxu0 0.0
    %1816 = vmatpush2.msra.mxu0 0.0
    %1817 = vmatprep.subr.mxu0 0.0
    %1818 = vmatpush2.msra.mxu0 0.0
    %1819 = vmatprep.subr.mxu0 %v1758
    %1820 = vmatpush2.msra.mxu0 %v1757
    %1821 = vmatprep.subr.mxu0 %v1756
    %1822 = vmatpush2.msra.mxu0 %v1755
    %1823 = vmatprep.subr.mxu0 %v1754
    %1824 = vmatpush2.msra.mxu0 %v1753
    %1825 = vmatprep.subr.mxu0 %v1752
    %1826 = vmatpush2.msra.mxu0 %v1751
    %1827 = vmatprep.subr.mxu0 %v1750
    %1828 = vmatpush2.msra.mxu0 %v1749
    %1829 = vmatprep.subr.mxu0 %v1748
    %1830 = vmatpush2.msra.mxu0 %v1747
    %1831 = vmatprep.subr.mxu0 %v1746
    %1832 = vmatpush2.msra.mxu0 %v1745
    %1833 = vmatprep.subr.mxu0 %v1744
    %1834 = vmatpush2.msra.mxu0 %v1743
    %1835 = vmatprep.mubr.f32.mxu0 %v1760
    %1836 = vmatmul.mubr.f32.gmra.mxu0 %v1682
    %v1837 = vpop.f32.mrf.mxu0
    %v1838 = vadd.f32 0.0, %v1837
    %v1839 = vpop.f32.mrf.mxu0
    %v1840 = vadd.f32 0.0, %v1839
    %1841 = vmatprep.mubr.f32.mxu0 %v1763
    %1842 = vmatmul.mubr.f32.gmra.mxu0 %v1683
    %v1843 = vpop.f32.mrf.mxu0
    %v1844 = vadd.f32 0.0, %v1843
    %v1845 = vpop.f32.mrf.mxu0
    %v1846 = vadd.f32 0.0, %v1845
    %1847 = vmatprep.mubr.f32.mxu0 %v1766
    %1848 = vmatmul.mubr.f32.gmra.mxu0 %v1684
    %v1849 = vpop.f32.mrf.mxu0
    %v1850 = vadd.f32 0.0, %v1849
    %v1851 = vpop.f32.mrf.mxu0
    %v1852 = vadd.f32 0.0, %v1851
    %1853 = vmatprep.mubr.f32.mxu0 %v1769
    %1854 = vmatmul.mubr.f32.gmra.mxu0 %v1685
    %v1855 = vpop.f32.mrf.mxu0
    %v1856 = vadd.f32 0.0, %v1855
    %v1857 = vpop.f32.mrf.mxu0
    %v1858 = vadd.f32 0.0, %v1857
    %1859 = vdwg.mxu0
    %v1860 = vadd.f32 %v1657, %v1838
    %v1861 = vadd.f32 %v1658, %v1840
    %v1862 = vadd.f32 %v1659, %v1844
    %v1863 = vadd.f32 %v1660, %v1846
    %v1864 = vadd.f32 %v1661, %v1850
    %v1865 = vadd.f32 %v1662, %v1852
    %v1866 = vadd.f32 %v1663, %v1856
    %v1867 = vadd.f32 %v1664, %v1858
    %v1868 = vld [vmem:[%s5] sm:$0x3]
    %v1870 = vlaneseq
    %v1871 = vshrl.u32 %v1870, 7
    %v1872 = vsub.s32 0, %v1871
    %v1873 = vrot.slane %v1868, %v1872
    %v1874 = vlaneseq
    %v1875 = vshrl.u32 %v1874, 7
    %v1876 = vsub.s32 1, %v1875
    %v1877 = vrot.slane %v1868, %v1876
    %v1880 = vadd.f32 %v1860, %v1873
    %v1881 = vadd.f32 %v1861, %v1877
    %v1882 = vadd.f32 %v1862, %v1873
    %v1883 = vadd.f32 %v1863, %v1877
    %v1884 = vadd.f32 %v1864, %v1873
    %v1885 = vadd.f32 %v1865, %v1877
    %v1886 = vadd.f32 %v1866, %v1873
    %v1887 = vadd.f32 %v1867, %v1877
    %v1896 = vrot.slane %v1880, 1
    %v1897 = vrot.slane %v1882, 1
    %v1898 = vsel %vm428, %v1896, %v1897
    %v1899 = vrot.slane %v1881, 1
    %v1900 = vrot.slane %v1883, 1
    %v1901 = vsel %vm428, %v1899, %v1900
    %v1902 = vrot.slane %v1884, 1
    %v1903 = vsel %vm428, %v1897, %v1902
    %v1904 = vrot.slane %v1885, 1
    %v1905 = vsel %vm428, %v1900, %v1904
    %v1906 = vrot.slane %v1886, 1
    %v1907 = vsel %vm428, %v1902, %v1906
    %v1908 = vrot.slane %v1887, 1
    %v1909 = vsel %vm428, %v1904, %v1908
    %v1920 = vsel %vm428, %v1906, %v1896
    %v1921 = vsel %vm428, %v1908, %v1899
    %v1922 = vmax.f32 %v1880, %v1898
    %v1923 = vmax.f32 %v1881, %v1901
    %v1924 = vmax.f32 %v1882, %v1903
    %v1925 = vmax.f32 %v1883, %v1905
    %v1926 = vmax.f32 %v1884, %v1907
    %v1927 = vmax.f32 %v1885, %v1909
    %v1928 = vmax.f32 %v1886, %v1920
    %v1929 = vmax.f32 %v1887, %v1921
    %v1930 = vld [vmem:[%s6] sm:$0xff]
    %v1931 = vld [vmem:[%s6 + $0x8] sm:$0x3f]
    %vm1932 = vcmask 261120
    %v1934 = vsel %vm1932, %v1930, 0
    %v1937 = vsel %vm1932, %v1931, 0
    %1939 = vmatprep.subr.mxu0 0.0
    %1940 = vmatpush1.msra.mxu0 0.0
    %1941 = vmatprep.subr.mxu0 0.0
    %1942 = vmatpush1.msra.mxu0 0.0
    %1943 = vmatprep.subr.mxu0 0.0
    %1944 = vmatpush1.msra.mxu0 0.0
    %1945 = vmatprep.subr.mxu0 0.0
    %1946 = vmatpush1.msra.mxu0 0.0
    %1947 = vmatprep.subr.mxu0 0.0
    %1948 = vmatpush1.msra.mxu0 0.0
    %1949 = vmatprep.subr.mxu0 0.0
    %1950 = vmatpush1.msra.mxu0 0.0
    %1951 = vmatprep.subr.mxu0 0.0
    %1952 = vmatpush1.msra.mxu0 0.0
    %1953 = vmatprep.subr.mxu0 0.0
    %1954 = vmatpush1.msra.mxu0 0.0
    %1955 = vmatprep.subr.mxu0 0.0
    %1956 = vmatpush1.msra.mxu0 0.0
    %1957 = vmatprep.subr.mxu0 0.0
    %1958 = vmatpush1.msra.mxu0 0.0
    %1959 = vmatprep.subr.mxu0 0.0
    %1960 = vmatpush1.msra.mxu0 0.0
    %1961 = vmatprep.subr.mxu0 0.0
    %1962 = vmatpush1.msra.mxu0 0.0
    %1963 = vmatprep.subr.mxu0 %v1929
    %1964 = vmatpush1.msra.mxu0 %v1928
    %1965 = vmatprep.subr.mxu0 %v1927
    %1966 = vmatpush1.msra.mxu0 %v1926
    %1967 = vmatprep.subr.mxu0 %v1925
    %1968 = vmatpush1.msra.mxu0 %v1924
    %1969 = vmatprep.subr.mxu0 %v1923
    %1970 = vmatpush1.msra.mxu0 %v1922
    %1971 = vmatprep.subr.mxu0 0.0
    %1972 = vmatpush2.msra.mxu0 0.0
    %1973 = vmatprep.subr.mxu0 0.0
    %1974 = vmatpush2.msra.mxu0 0.0
    %1975 = vmatprep.subr.mxu0 0.0
    %1976 = vmatpush2.msra.mxu0 0.0
    %1977 = vmatprep.subr.mxu0 0.0
    %1978 = vmatpush2.msra.mxu0 0.0
    %1979 = vmatprep.subr.mxu0 0.0
    %1980 = vmatpush2.msra.mxu0 0.0
    %1981 = vmatprep.subr.mxu0 0.0
    %1982 = vmatpush2.msra.mxu0 0.0
    %1983 = vmatprep.subr.mxu0 0.0
    %1984 = vmatpush2.msra.mxu0 0.0
    %1985 = vmatprep.subr.mxu0 0.0
    %1986 = vmatpush2.msra.mxu0 0.0
    %1987 = vmatprep.subr.mxu0 0.0
    %1988 = vmatpush2.msra.mxu0 0.0
    %1989 = vmatprep.subr.mxu0 0.0
    %1990 = vmatpush2.msra.mxu0 0.0
    %1991 = vmatprep.subr.mxu0 0.0
    %1992 = vmatpush2.msra.mxu0 0.0
    %1993 = vmatprep.subr.mxu0 0.0
    %1994 = vmatpush2.msra.mxu0 0.0
    %1995 = vmatprep.subr.mxu0 0.0
    %1996 = vmatpush2.msra.mxu0 0.0
    %1997 = vmatprep.subr.mxu0 0.0
    %1998 = vmatpush2.msra.mxu0 0.0
    %1999 = vmatprep.subr.mxu0 0.0
    %2000 = vmatpush2.msra.mxu0 0.0
    %2001 = vmatprep.subr.mxu0 0.0
    %2002 = vmatpush2.msra.mxu0 0.0
    %2003 = vmatprep.mubr.f32.mxu0 0.0
    %2004 = vmatmul.mubr.f32.gmra.mxu0 %v1934
    %v2005 = vpop.f32.mrf.mxu0
    %v2006 = vadd.f32 0.0, %v2005
    %v2007 = vpop.f32.mrf.mxu0
    %v2008 = vadd.f32 0.0, %v2007
    %2009 = vmatprep.mubr.f32.mxu0 0.0
    %2010 = vmatmul.mubr.f32.gmra.mxu0 %v1937
    %v2011 = vpop.f32.mrf.mxu0
    %v2012 = vadd.f32 0.0, %v2011
    %v2013 = vpop.f32.mrf.mxu0
    %v2014 = vadd.f32 0.0, %v2013
    %2015 = vdwg.mxu0
    %2020 = vrot.lane.b32.xlu0 %v2006, 127
    %v2021 = vpop.permute.xlu0 %2020
    %2022 = vrot.lane.b32.xlu0 %v2008, 127
    %v2023 = vpop.permute.xlu0 %2022
    %2024 = vrot.lane.b32.xlu0 %v2012, 127
    %v2025 = vpop.permute.xlu0 %2024
    %2026 = vrot.lane.b32.xlu0 %v2014, 127
    %v2027 = vpop.permute.xlu0 %2026
    %v2028 = vsel %vm1092, %v2021, %v2023
    %v2029 = vsel %vm1092, %v2025, %v2027
    %v2036 = vsel %vm1092, %v2023, %v2021
    %v2037 = vsel %vm1092, %v2027, %v2025
    %v2038 = vmax.f32 %v2006, %v2028
    %v2039 = vmax.f32 %v2008, %v2036
    %v2040 = vmax.f32 %v2012, %v2029
    %v2041 = vmax.f32 %v2014, %v2037
    %v2042 = vmax.f32 %v2038, 0.0
    %v2043 = vmax.f32 %v2039, 0.0
    %v2044 = vmax.f32 %v2040, 0.0
    %v2045 = vmax.f32 %v2041, 0.0
    %v2048 = vrot.slane %v2042, 2
    %v2049 = vrot.slane %v2043, 2
    %v2052 = vrot.slane %v2042, 4
    %v2053 = vrot.slane %v2043, 4
    %v2056 = vrot.slane %v2042, 6
    %v2057 = vrot.slane %v2043, 6
    %v2062 = vrot.slane %v2044, 2
    %v2063 = vrot.slane %v2045, 2
    %v2066 = vrot.slane %v2044, 4
    %v2067 = vrot.slane %v2045, 4
    %v2070 = vld [vmem:[%s7] sm:$0xff]
    %v2071 = vld [vmem:[%s7 + $0x8] sm:$0xff]
    %v2072 = vld [vmem:[%s7 + $0x10] sm:$0xff]
    %v2073 = vld [vmem:[%s7 + $0x18] sm:$0xff]
    %v2074 = vld [vmem:[%s7 + $0x20] sm:$0xff]
    %v2075 = vld [vmem:[%s7 + $0x28] sm:$0xff]
    %v2076 = vld [vmem:[%s7 + $0x30] sm:$0xff]
    %v2077 = vld [vmem:[%s7 + $0x38] sm:$0xff]
    %v2078 = vld [vmem:[%s7 + $0x40] sm:$0xff]
    %v2079 = vld [vmem:[%s7 + $0x48] sm:$0xff]
    %v2080 = vld [vmem:[%s7 + $0x50] sm:$0xff]
    %v2081 = vld [vmem:[%s7 + $0x58] sm:$0xff]
    %v2082 = vld [vmem:[%s7 + $0x60] sm:$0xff]
    %v2083 = vld [vmem:[%s7 + $0x68] sm:$0xff]
    %v2084 = vld [vmem:[%s7 + $0x70] sm:$0xff]
    %v2085 = vld [vmem:[%s7 + $0x78] sm:$0xff]
    %v2086 = vld [vmem:[%s7 + $0x80] sm:$0xff]
    %v2087 = vld [vmem:[%s7 + $0x88] sm:$0xff]
    %v2088 = vld [vmem:[%s7 + $0x90] sm:$0xff]
    %v2089 = vld [vmem:[%s7 + $0x98] sm:$0xff]
    %v2090 = vld [vmem:[%s7 + $0xa0] sm:$0xff]
    %v2091 = vld [vmem:[%s7 + $0xa8] sm:$0xff]
    %v2092 = vld [vmem:[%s7 + $0xb0] sm:$0xff]
    %v2093 = vld [vmem:[%s7 + $0xb8] sm:$0xff]
    %v2094 = vld [vmem:[%s7 + $0xc0] sm:$0xff]
    %v2095 = vld [vmem:[%s7 + $0xc8] sm:$0xff]
    %v2096 = vld [vmem:[%s7 + $0xd0] sm:$0xff]
    %v2097 = vld [vmem:[%s7 + $0xd8] sm:$0xff]
    %v2098 = vld [vmem:[%s7 + $0xe0] sm:$0xff]
    %v2099 = vld [vmem:[%s7 + $0xe8] sm:$0xff]
    %v2100 = vld [vmem:[%s7 + $0xf0] sm:$0xff]
    %v2101 = vld [vmem:[%s7 + $0xf8] sm:$0xff]
    %v2102 = vld [vmem:[%s7 + $0x100] sm:$0xff]
    %v2103 = vld [vmem:[%s7 + $0x108] sm:$0xff]
    %v2104 = vld [vmem:[%s7 + $0x110] sm:$0xff]
    %v2105 = vld [vmem:[%s7 + $0x118] sm:$0xff]
    %v2106 = vld [vmem:[%s7 + $0x120] sm:$0xff]
    %v2107 = vld [vmem:[%s7 + $0x128] sm:$0xff]
    %v2108 = vld [vmem:[%s7 + $0x130] sm:$0xff]
    %v2109 = vld [vmem:[%s7 + $0x138] sm:$0xff]
    %v2110 = vld [vmem:[%s7 + $0x140] sm:$0xff]
    %v2111 = vld [vmem:[%s7 + $0x148] sm:$0xff]
    %v2112 = vld [vmem:[%s7 + $0x150] sm:$0xff]
    %v2113 = vld [vmem:[%s7 + $0x158] sm:$0xff]
    %v2114 = vld [vmem:[%s7 + $0x160] sm:$0xff]
    %v2115 = vld [vmem:[%s7 + $0x168] sm:$0xff]
    %v2116 = vld [vmem:[%s7 + $0x170] sm:$0xff]
    %v2117 = vld [vmem:[%s7 + $0x178] sm:$0xff]
    %v2118 = vld [vmem:[%s7 + $0x180] sm:$0xff]
    %v2119 = vld [vmem:[%s7 + $0x188] sm:$0xff]
    %v2120 = vld [vmem:[%s7 + $0x190] sm:$0xff]
    %v2121 = vld [vmem:[%s7 + $0x198] sm:$0xff]
    %v2122 = vld [vmem:[%s7 + $0x1a0] sm:$0xff]
    %v2123 = vld [vmem:[%s7 + $0x1a8] sm:$0xff]
    %v2124 = vld [vmem:[%s7 + $0x1b0] sm:$0xff]
    %v2125 = vld [vmem:[%s7 + $0x1b8] sm:$0xff]
    %v2126 = vld [vmem:[%s7 + $0x1c0] sm:$0xff]
    %v2127 = vld [vmem:[%s7 + $0x1c8] sm:$0xff]
    %v2128 = vld [vmem:[%s7 + $0x1d0] sm:$0xff]
    %v2129 = vld [vmem:[%s7 + $0x1d8] sm:$0xff]
    %v2130 = vld [vmem:[%s7 + $0x1e0] sm:$0xff]
    %v2131 = vld [vmem:[%s7 + $0x1e8] sm:$0xff]
    %v2132 = vld [vmem:[%s7 + $0x1f0] sm:$0xff]
    %v2133 = vld [vmem:[%s7 + $0x1f8] sm:$0xff]
    %v2134 = vld [vmem:[%s7 + $0x200] sm:$0xff]
    %v2135 = vld [vmem:[%s7 + $0x208] sm:$0xff]
    %v2136 = vld [vmem:[%s7 + $0x210] sm:$0xff]
    %v2137 = vld [vmem:[%s7 + $0x218] sm:$0xff]
    %v2138 = vld [vmem:[%s7 + $0x220] sm:$0xff]
    %v2139 = vld [vmem:[%s7 + $0x228] sm:$0xff]
    %v2140 = vld [vmem:[%s7 + $0x230] sm:$0xff]
    %v2141 = vld [vmem:[%s7 + $0x238] sm:$0xff]
    %v2142 = vld [vmem:[%s7 + $0x240] sm:$0xff]
    %v2143 = vld [vmem:[%s7 + $0x248] sm:$0xff]
    %v2144 = vld [vmem:[%s7 + $0x250] sm:$0xff]
    %v2145 = vld [vmem:[%s7 + $0x258] sm:$0xff]
    %v2146 = vld [vmem:[%s7 + $0x260] sm:$0xff]
    %v2147 = vld [vmem:[%s7 + $0x268] sm:$0xff]
    %v2148 = vld [vmem:[%s7 + $0x270] sm:$0xff]
    %v2149 = vld [vmem:[%s7 + $0x278] sm:$0xff]
    %v2150 = vld [vmem:[%s7 + $0x280] sm:$0xff]
    %v2151 = vld [vmem:[%s7 + $0x288] sm:$0xff]
    %v2152 = vld [vmem:[%s7 + $0x290] sm:$0xff]
    %v2153 = vld [vmem:[%s7 + $0x298] sm:$0xff]
    %v2154 = vld [vmem:[%s7 + $0x2a0] sm:$0xff]
    %v2155 = vld [vmem:[%s7 + $0x2a8] sm:$0xff]
    %v2156 = vld [vmem:[%s7 + $0x2b0] sm:$0xff]
    %v2157 = vld [vmem:[%s7 + $0x2b8] sm:$0xff]
    %v2158 = vld [vmem:[%s7 + $0x2c0] sm:$0xff]
    %v2159 = vld [vmem:[%s7 + $0x2c8] sm:$0xff]
    %v2160 = vld [vmem:[%s7 + $0x2d0] sm:$0xff]
    %v2161 = vld [vmem:[%s7 + $0x2d8] sm:$0xff]
    %v2162 = vld [vmem:[%s7 + $0x2e0] sm:$0xff]
    %v2163 = vld [vmem:[%s7 + $0x2e8] sm:$0xff]
    %v2164 = vld [vmem:[%s7 + $0x2f0] sm:$0xff]
    %v2165 = vld [vmem:[%s7 + $0x2f8] sm:$0xff]
    %v2166 = vld [vmem:[%s7 + $0x300] sm:$0xff]
    %v2167 = vld [vmem:[%s7 + $0x308] sm:$0xff]
    %v2168 = vld [vmem:[%s7 + $0x310] sm:$0xff]
    %v2169 = vld [vmem:[%s7 + $0x318] sm:$0xff]
    %v2170 = vld [vmem:[%s7 + $0x320] sm:$0xff]
    %v2171 = vld [vmem:[%s7 + $0x328] sm:$0xff]
    %v2172 = vld [vmem:[%s7 + $0x330] sm:$0xff]
    %v2173 = vld [vmem:[%s7 + $0x338] sm:$0xff]
    %v2174 = vld [vmem:[%s7 + $0x340] sm:$0xff]
    %v2175 = vld [vmem:[%s7 + $0x348] sm:$0xff]
    %v2176 = vld [vmem:[%s7 + $0x350] sm:$0xff]
    %v2177 = vld [vmem:[%s7 + $0x358] sm:$0xff]
    %v2178 = vld [vmem:[%s7 + $0x360] sm:$0xff]
    %v2179 = vld [vmem:[%s7 + $0x368] sm:$0xff]
    %v2180 = vld [vmem:[%s7 + $0x370] sm:$0xff]
    %v2181 = vld [vmem:[%s7 + $0x378] sm:$0xff]
    %v2182 = vld [vmem:[%s7 + $0x380] sm:$0xff]
    %v2183 = vld [vmem:[%s7 + $0x388] sm:$0xff]
    %v2184 = vld [vmem:[%s7 + $0x390] sm:$0xff]
    %v2185 = vld [vmem:[%s7 + $0x398] sm:$0xff]
    %v2186 = vld [vmem:[%s7 + $0x3a0] sm:$0xff]
    %v2187 = vld [vmem:[%s7 + $0x3a8] sm:$0xff]
    %v2188 = vld [vmem:[%s7 + $0x3b0] sm:$0xff]
    %v2189 = vld [vmem:[%s7 + $0x3b8] sm:$0xff]
    %v2190 = vld [vmem:[%s7 + $0x3c0] sm:$0xff]
    %v2191 = vld [vmem:[%s7 + $0x3c8] sm:$0xff]
    %v2192 = vld [vmem:[%s7 + $0x3d0] sm:$0xff]
    %v2193 = vld [vmem:[%s7 + $0x3d8] sm:$0xff]
    %v2194 = vld [vmem:[%s7 + $0x3e0] sm:$0xff]
    %v2195 = vld [vmem:[%s7 + $0x3e8] sm:$0xff]
    %v2196 = vld [vmem:[%s7 + $0x3f0] sm:$0xff]
    %v2197 = vld [vmem:[%s7 + $0x3f8] sm:$0xff]
    %v2198 = vld [vmem:[%s7 + $0x400] sm:$0xff]
    %v2199 = vld [vmem:[%s7 + $0x408] sm:$0xff]
    %v2200 = vld [vmem:[%s7 + $0x410] sm:$0xff]
    %v2201 = vld [vmem:[%s7 + $0x418] sm:$0xff]
    %v2202 = vld [vmem:[%s7 + $0x420] sm:$0xff]
    %v2203 = vld [vmem:[%s7 + $0x428] sm:$0xff]
    %v2204 = vld [vmem:[%s7 + $0x430] sm:$0xff]
    %v2205 = vld [vmem:[%s7 + $0x438] sm:$0xff]
    %v2206 = vld [vmem:[%s7 + $0x440] sm:$0xff]
    %v2207 = vld [vmem:[%s7 + $0x448] sm:$0xff]
    %v2208 = vld [vmem:[%s7 + $0x450] sm:$0xff]
    %v2209 = vld [vmem:[%s7 + $0x458] sm:$0xff]
    %v2210 = vld [vmem:[%s7 + $0x460] sm:$0xff]
    %v2211 = vld [vmem:[%s7 + $0x468] sm:$0xff]
    %v2212 = vld [vmem:[%s7 + $0x470] sm:$0xff]
    %v2213 = vld [vmem:[%s7 + $0x478] sm:$0xff]
    %v2214 = vld [vmem:[%s7 + $0x480] sm:$0xff]
    %v2215 = vld [vmem:[%s7 + $0x488] sm:$0xff]
    %v2216 = vld [vmem:[%s7 + $0x490] sm:$0xff]
    %v2217 = vld [vmem:[%s7 + $0x498] sm:$0xff]
    %v2218 = vld [vmem:[%s7 + $0x4a0] sm:$0xff]
    %v2219 = vld [vmem:[%s7 + $0x4a8] sm:$0xff]
    %v2220 = vld [vmem:[%s7 + $0x4b0] sm:$0xff]
    %v2221 = vld [vmem:[%s7 + $0x4b8] sm:$0xff]
    %v2222 = vld [vmem:[%s7 + $0x4c0] sm:$0xff]
    %v2223 = vld [vmem:[%s7 + $0x4c8] sm:$0xff]
    %v2224 = vld [vmem:[%s7 + $0x4d0] sm:$0xff]
    %v2225 = vld [vmem:[%s7 + $0x4d8] sm:$0xff]
    %v2226 = vld [vmem:[%s7 + $0x4e0] sm:$0xff]
    %v2227 = vld [vmem:[%s7 + $0x4e8] sm:$0xff]
    %v2228 = vld [vmem:[%s7 + $0x4f0] sm:$0xff]
    %v2229 = vld [vmem:[%s7 + $0x4f8] sm:$0xff]
    %v2230 = vld [vmem:[%s7 + $0x500] sm:$0xff]
    %v2231 = vld [vmem:[%s7 + $0x508] sm:$0xff]
    %v2232 = vld [vmem:[%s7 + $0x510] sm:$0xff]
    %v2233 = vld [vmem:[%s7 + $0x518] sm:$0xff]
    %v2234 = vld [vmem:[%s7 + $0x520] sm:$0xff]
    %v2235 = vld [vmem:[%s7 + $0x528] sm:$0xff]
    %v2236 = vld [vmem:[%s7 + $0x530] sm:$0xff]
    %v2237 = vld [vmem:[%s7 + $0x538] sm:$0xff]
    %v2238 = vld [vmem:[%s7 + $0x540] sm:$0xff]
    %v2239 = vld [vmem:[%s7 + $0x548] sm:$0xff]
    %v2240 = vld [vmem:[%s7 + $0x550] sm:$0xff]
    %v2241 = vld [vmem:[%s7 + $0x558] sm:$0xff]
    %v2242 = vld [vmem:[%s7 + $0x560] sm:$0xff]
    %v2243 = vld [vmem:[%s7 + $0x568] sm:$0xff]
    %v2244 = vld [vmem:[%s7 + $0x570] sm:$0xff]
    %v2245 = vld [vmem:[%s7 + $0x578] sm:$0xff]
    %v2246 = vld [vmem:[%s7 + $0x580] sm:$0xff]
    %v2247 = vld [vmem:[%s7 + $0x588] sm:$0xff]
    %v2248 = vld [vmem:[%s7 + $0x590] sm:$0xff]
    %v2249 = vld [vmem:[%s7 + $0x598] sm:$0xff]
    %v2250 = vld [vmem:[%s7 + $0x5a0] sm:$0xff]
    %v2251 = vld [vmem:[%s7 + $0x5a8] sm:$0xff]
    %v2252 = vld [vmem:[%s7 + $0x5b0] sm:$0xff]
    %v2253 = vld [vmem:[%s7 + $0x5b8] sm:$0xff]
    %v2254 = vld [vmem:[%s7 + $0x5c0] sm:$0xff]
    %v2255 = vld [vmem:[%s7 + $0x5c8] sm:$0xff]
    %v2256 = vld [vmem:[%s7 + $0x5d0] sm:$0xff]
    %v2257 = vld [vmem:[%s7 + $0x5d8] sm:$0xff]
    %v2258 = vld [vmem:[%s7 + $0x5e0] sm:$0xff]
    %v2259 = vld [vmem:[%s7 + $0x5e8] sm:$0xff]
    %v2260 = vld [vmem:[%s7 + $0x5f0] sm:$0xff]
    %v2261 = vld [vmem:[%s7 + $0x5f8] sm:$0xff]
    %v2262 = vld [vmem:[%s7 + $0x600] sm:$0xff]
    %v2263 = vld [vmem:[%s7 + $0x608] sm:$0xff]
    %v2264 = vld [vmem:[%s7 + $0x610] sm:$0xff]
    %v2265 = vld [vmem:[%s7 + $0x618] sm:$0xff]
    %v2266 = vld [vmem:[%s7 + $0x620] sm:$0xff]
    %v2267 = vld [vmem:[%s7 + $0x628] sm:$0xff]
    %v2268 = vld [vmem:[%s7 + $0x630] sm:$0xff]
    %v2269 = vld [vmem:[%s7 + $0x638] sm:$0xff]
    %v2270 = vld [vmem:[%s7 + $0x640] sm:$0xff]
    %v2271 = vld [vmem:[%s7 + $0x648] sm:$0xff]
    %v2272 = vld [vmem:[%s7 + $0x650] sm:$0xff]
    %v2273 = vld [vmem:[%s7 + $0x658] sm:$0xff]
    %v2274 = vld [vmem:[%s7 + $0x660] sm:$0xff]
    %v2275 = vld [vmem:[%s7 + $0x668] sm:$0xff]
    %v2276 = vld [vmem:[%s7 + $0x670] sm:$0xff]
    %v2277 = vld [vmem:[%s7 + $0x678] sm:$0xff]
    %v2278 = vld [vmem:[%s7 + $0x680] sm:$0xff]
    %v2279 = vld [vmem:[%s7 + $0x688] sm:$0xff]
    %v2280 = vld [vmem:[%s7 + $0x690] sm:$0xff]
    %v2281 = vld [vmem:[%s7 + $0x698] sm:$0xff]
    %v2282 = vld [vmem:[%s7 + $0x6a0] sm:$0xff]
    %v2283 = vld [vmem:[%s7 + $0x6a8] sm:$0xff]
    %v2284 = vld [vmem:[%s7 + $0x6b0] sm:$0xff]
    %v2285 = vld [vmem:[%s7 + $0x6b8] sm:$0xff]
    %v2286 = vld [vmem:[%s7 + $0x6c0] sm:$0xff]
    %v2287 = vld [vmem:[%s7 + $0x6c8] sm:$0xff]
    %v2288 = vld [vmem:[%s7 + $0x6d0] sm:$0xff]
    %v2289 = vld [vmem:[%s7 + $0x6d8] sm:$0xff]
    %v2290 = vld [vmem:[%s7 + $0x6e0] sm:$0xff]
    %v2291 = vld [vmem:[%s7 + $0x6e8] sm:$0xff]
    %v2292 = vld [vmem:[%s7 + $0x6f0] sm:$0xff]
    %v2293 = vld [vmem:[%s7 + $0x6f8] sm:$0xff]
    %v2294 = vld [vmem:[%s8] sm:$0x1]
    %v2296 = vlaneseq
    %v2297 = vshrl.u32 %v2296, 7
    %v2298 = vsub.s32 0, %v2297
    %v2299 = vrot.slane %v2294, %v2298
    %2301 = vmatprep.subr.mxu0 0.0
    %2302 = vmatpush1.msra.mxu0 %v2085
    %2303 = vmatprep.subr.mxu0 0.0
    %2304 = vmatpush1.msra.mxu0 %v2084
    %2305 = vmatprep.subr.mxu0 0.0
    %2306 = vmatpush1.msra.mxu0 %v2083
    %2307 = vmatprep.subr.mxu0 0.0
    %2308 = vmatpush1.msra.mxu0 %v2082
    %2309 = vmatprep.subr.mxu0 0.0
    %2310 = vmatpush1.msra.mxu0 %v2081
    %2311 = vmatprep.subr.mxu0 0.0
    %2312 = vmatpush1.msra.mxu0 %v2080
    %2313 = vmatprep.subr.mxu0 0.0
    %2314 = vmatpush1.msra.mxu0 %v2079
    %2315 = vmatprep.subr.mxu0 0.0
    %2316 = vmatpush1.msra.mxu0 %v2078
    %2317 = vmatprep.subr.mxu0 0.0
    %2318 = vmatpush1.msra.mxu0 %v2077
    %2319 = vmatprep.subr.mxu0 0.0
    %2320 = vmatpush1.msra.mxu0 %v2076
    %2321 = vmatprep.subr.mxu0 0.0
    %2322 = vmatpush1.msra.mxu0 %v2075
    %2323 = vmatprep.subr.mxu0 0.0
    %2324 = vmatpush1.msra.mxu0 %v2074
    %2325 = vmatprep.subr.mxu0 0.0
    %2326 = vmatpush1.msra.mxu0 %v2073
    %2327 = vmatprep.subr.mxu0 0.0
    %2328 = vmatpush1.msra.mxu0 %v2072
    %2329 = vmatprep.subr.mxu0 0.0
    %2330 = vmatpush1.msra.mxu0 %v2071
    %2331 = vmatprep.subr.mxu0 0.0
    %2332 = vmatpush1.msra.mxu0 %v2070
    %2333 = vmatprep.subr.mxu0 0.0
    %2334 = vmatpush2.msra.mxu0 %v2101
    %2335 = vmatprep.subr.mxu0 0.0
    %2336 = vmatpush2.msra.mxu0 %v2100
    %2337 = vmatprep.subr.mxu0 0.0
    %2338 = vmatpush2.msra.mxu0 %v2099
    %2339 = vmatprep.subr.mxu0 0.0
    %2340 = vmatpush2.msra.mxu0 %v2098
    %2341 = vmatprep.subr.mxu0 0.0
    %2342 = vmatpush2.msra.mxu0 %v2097
    %2343 = vmatprep.subr.mxu0 0.0
    %2344 = vmatpush2.msra.mxu0 %v2096
    %2345 = vmatprep.subr.mxu0 0.0
    %2346 = vmatpush2.msra.mxu0 %v2095
    %2347 = vmatprep.subr.mxu0 0.0
    %2348 = vmatpush2.msra.mxu0 %v2094
    %2349 = vmatprep.subr.mxu0 0.0
    %2350 = vmatpush2.msra.mxu0 %v2093
    %2351 = vmatprep.subr.mxu0 0.0
    %2352 = vmatpush2.msra.mxu0 %v2092
    %2353 = vmatprep.subr.mxu0 0.0
    %2354 = vmatpush2.msra.mxu0 %v2091
    %2355 = vmatprep.subr.mxu0 0.0
    %2356 = vmatpush2.msra.mxu0 %v2090
    %2357 = vmatprep.subr.mxu0 0.0
    %2358 = vmatpush2.msra.mxu0 %v2089
    %2359 = vmatprep.subr.mxu0 0.0
    %2360 = vmatpush2.msra.mxu0 %v2088
    %2361 = vmatprep.subr.mxu0 0.0
    %2362 = vmatpush2.msra.mxu0 %v2087
    %2363 = vmatprep.subr.mxu0 0.0
    %2364 = vmatpush2.msra.mxu0 %v2086
    %2365 = vmatprep.mubr.f32.mxu0 %v2043
    %2366 = vmatmul.mubr.f32.gmra.mxu0 %v2042
    %v2367 = vpop.f32.mrf.mxu0
    %v2368 = vadd.f32 %v2299, %v2367
    %v2369 = vpop.f32.mrf.mxu0
    %2370 = vdwg.mxu0
    %2371 = vmatprep.subr.mxu0 0.0
    %2372 = vmatpush1.msra.mxu0 %v2117
    %2373 = vmatprep.subr.mxu0 0.0
    %2374 = vmatpush1.msra.mxu0 %v2116
    %2375 = vmatprep.subr.mxu0 0.0
    %2376 = vmatpush1.msra.mxu0 %v2115
    %2377 = vmatprep.subr.mxu0 0.0
    %2378 = vmatpush1.msra.mxu0 %v2114
    %2379 = vmatprep.subr.mxu0 0.0
    %2380 = vmatpush1.msra.mxu0 %v2113
    %2381 = vmatprep.subr.mxu0 0.0
    %2382 = vmatpush1.msra.mxu0 %v2112
    %2383 = vmatprep.subr.mxu0 0.0
    %2384 = vmatpush1.msra.mxu0 %v2111
    %2385 = vmatprep.subr.mxu0 0.0
    %2386 = vmatpush1.msra.mxu0 %v2110
    %2387 = vmatprep.subr.mxu0 0.0
    %2388 = vmatpush1.msra.mxu0 %v2109
    %2389 = vmatprep.subr.mxu0 0.0
    %2390 = vmatpush1.msra.mxu0 %v2108
    %2391 = vmatprep.subr.mxu0 0.0
    %2392 = vmatpush1.msra.mxu0 %v2107
    %2393 = vmatprep.subr.mxu0 0.0
    %2394 = vmatpush1.msra.mxu0 %v2106
    %2395 = vmatprep.subr.mxu0 0.0
    %2396 = vmatpush1.msra.mxu0 %v2105
    %2397 = vmatprep.subr.mxu0 0.0
    %2398 = vmatpush1.msra.mxu0 %v2104
    %2399 = vmatprep.subr.mxu0 0.0
    %2400 = vmatpush1.msra.mxu0 %v2103
    %2401 = vmatprep.subr.mxu0 0.0
    %2402 = vmatpush1.msra.mxu0 %v2102
    %2403 = vmatprep.subr.mxu0 0.0
    %2404 = vmatpush2.msra.mxu0 %v2133
    %2405 = vmatprep.subr.mxu0 0.0
    %2406 = vmatpush2.msra.mxu0 %v2132
    %2407 = vmatprep.subr.mxu0 0.0
    %2408 = vmatpush2.msra.mxu0 %v2131
    %2409 = vmatprep.subr.mxu0 0.0
    %2410 = vmatpush2.msra.mxu0 %v2130
    %2411 = vmatprep.subr.mxu0 0.0
    %2412 = vmatpush2.msra.mxu0 %v2129
    %2413 = vmatprep.subr.mxu0 0.0
    %2414 = vmatpush2.msra.mxu0 %v2128
    %2415 = vmatprep.subr.mxu0 0.0
    %2416 = vmatpush2.msra.mxu0 %v2127
    %2417 = vmatprep.subr.mxu0 0.0
    %2418 = vmatpush2.msra.mxu0 %v2126
    %2419 = vmatprep.subr.mxu0 0.0
    %2420 = vmatpush2.msra.mxu0 %v2125
    %2421 = vmatprep.subr.mxu0 0.0
    %2422 = vmatpush2.msra.mxu0 %v2124
    %2423 = vmatprep.subr.mxu0 0.0
    %2424 = vmatpush2.msra.mxu0 %v2123
    %2425 = vmatprep.subr.mxu0 0.0
    %2426 = vmatpush2.msra.mxu0 %v2122
    %2427 = vmatprep.subr.mxu0 0.0
    %2428 = vmatpush2.msra.mxu0 %v2121
    %2429 = vmatprep.subr.mxu0 0.0
    %2430 = vmatpush2.msra.mxu0 %v2120
    %2431 = vmatprep.subr.mxu0 0.0
    %2432 = vmatpush2.msra.mxu0 %v2119
    %2433 = vmatprep.subr.mxu0 0.0
    %2434 = vmatpush2.msra.mxu0 %v2118
    %2435 = vmatprep.mubr.f32.mxu0 %v2049
    %2436 = vmatmul.mubr.f32.gmra.mxu0 %v2048
    %v2437 = vpop.f32.mrf.mxu0
    %v2438 = vadd.f32 %v2368, %v2437
    %v2439 = vpop.f32.mrf.mxu0
    %2440 = vdwg.mxu0
    %2441 = vmatprep.subr.mxu0 0.0
    %2442 = vmatpush1.msra.mxu0 %v2149
    %2443 = vmatprep.subr.mxu0 0.0
    %2444 = vmatpush1.msra.mxu0 %v2148
    %2445 = vmatprep.subr.mxu0 0.0
    %2446 = vmatpush1.msra.mxu0 %v2147
    %2447 = vmatprep.subr.mxu0 0.0
    %2448 = vmatpush1.msra.mxu0 %v2146
    %2449 = vmatprep.subr.mxu0 0.0
    %2450 = vmatpush1.msra.mxu0 %v2145
    %2451 = vmatprep.subr.mxu0 0.0
    %2452 = vmatpush1.msra.mxu0 %v2144
    %2453 = vmatprep.subr.mxu0 0.0
    %2454 = vmatpush1.msra.mxu0 %v2143
    %2455 = vmatprep.subr.mxu0 0.0
    %2456 = vmatpush1.msra.mxu0 %v2142
    %2457 = vmatprep.subr.mxu0 0.0
    %2458 = vmatpush1.msra.mxu0 %v2141
    %2459 = vmatprep.subr.mxu0 0.0
    %2460 = vmatpush1.msra.mxu0 %v2140
    %2461 = vmatprep.subr.mxu0 0.0
    %2462 = vmatpush1.msra.mxu0 %v2139
    %2463 = vmatprep.subr.mxu0 0.0
    %2464 = vmatpush1.msra.mxu0 %v2138
    %2465 = vmatprep.subr.mxu0 0.0
    %2466 = vmatpush1.msra.mxu0 %v2137
    %2467 = vmatprep.subr.mxu0 0.0
    %2468 = vmatpush1.msra.mxu0 %v2136
    %2469 = vmatprep.subr.mxu0 0.0
    %2470 = vmatpush1.msra.mxu0 %v2135
    %2471 = vmatprep.subr.mxu0 0.0
    %2472 = vmatpush1.msra.mxu0 %v2134
    %2473 = vmatprep.subr.mxu0 0.0
    %2474 = vmatpush2.msra.mxu0 %v2165
    %2475 = vmatprep.subr.mxu0 0.0
    %2476 = vmatpush2.msra.mxu0 %v2164
    %2477 = vmatprep.subr.mxu0 0.0
    %2478 = vmatpush2.msra.mxu0 %v2163
    %2479 = vmatprep.subr.mxu0 0.0
    %2480 = vmatpush2.msra.mxu0 %v2162
    %2481 = vmatprep.subr.mxu0 0.0
    %2482 = vmatpush2.msra.mxu0 %v2161
    %2483 = vmatprep.subr.mxu0 0.0
    %2484 = vmatpush2.msra.mxu0 %v2160
    %2485 = vmatprep.subr.mxu0 0.0
    %2486 = vmatpush2.msra.mxu0 %v2159
    %2487 = vmatprep.subr.mxu0 0.0
    %2488 = vmatpush2.msra.mxu0 %v2158
    %2489 = vmatprep.subr.mxu0 0.0
    %2490 = vmatpush2.msra.mxu0 %v2157
    %2491 = vmatprep.subr.mxu0 0.0
    %2492 = vmatpush2.msra.mxu0 %v2156
    %2493 = vmatprep.subr.mxu0 0.0
    %2494 = vmatpush2.msra.mxu0 %v2155
    %2495 = vmatprep.subr.mxu0 0.0
    %2496 = vmatpush2.msra.mxu0 %v2154
    %2497 = vmatprep.subr.mxu0 0.0
    %2498 = vmatpush2.msra.mxu0 %v2153
    %2499 = vmatprep.subr.mxu0 0.0
    %2500 = vmatpush2.msra.mxu0 %v2152
    %2501 = vmatprep.subr.mxu0 0.0
    %2502 = vmatpush2.msra.mxu0 %v2151
    %2503 = vmatprep.subr.mxu0 0.0
    %2504 = vmatpush2.msra.mxu0 %v2150
    %2505 = vmatprep.mubr.f32.mxu0 %v2053
    %2506 = vmatmul.mubr.f32.gmra.mxu0 %v2052
    %v2507 = vpop.f32.mrf.mxu0
    %v2508 = vadd.f32 %v2438, %v2507
    %v2509 = vpop.f32.mrf.mxu0
    %2510 = vdwg.mxu0
    %2511 = vmatprep.subr.mxu0 0.0
    %2512 = vmatpush1.msra.mxu0 %v2181
    %2513 = vmatprep.subr.mxu0 0.0
    %2514 = vmatpush1.msra.mxu0 %v2180
    %2515 = vmatprep.subr.mxu0 0.0
    %2516 = vmatpush1.msra.mxu0 %v2179
    %2517 = vmatprep.subr.mxu0 0.0
    %2518 = vmatpush1.msra.mxu0 %v2178
    %2519 = vmatprep.subr.mxu0 0.0
    %2520 = vmatpush1.msra.mxu0 %v2177
    %2521 = vmatprep.subr.mxu0 0.0
    %2522 = vmatpush1.msra.mxu0 %v2176
    %2523 = vmatprep.subr.mxu0 0.0
    %2524 = vmatpush1.msra.mxu0 %v2175
    %2525 = vmatprep.subr.mxu0 0.0
    %2526 = vmatpush1.msra.mxu0 %v2174
    %2527 = vmatprep.subr.mxu0 0.0
    %2528 = vmatpush1.msra.mxu0 %v2173
    %2529 = vmatprep.subr.mxu0 0.0
    %2530 = vmatpush1.msra.mxu0 %v2172
    %2531 = vmatprep.subr.mxu0 0.0
    %2532 = vmatpush1.msra.mxu0 %v2171
    %2533 = vmatprep.subr.mxu0 0.0
    %2534 = vmatpush1.msra.mxu0 %v2170
    %2535 = vmatprep.subr.mxu0 0.0
    %2536 = vmatpush1.msra.mxu0 %v2169
    %2537 = vmatprep.subr.mxu0 0.0
    %2538 = vmatpush1.msra.mxu0 %v2168
    %2539 = vmatprep.subr.mxu0 0.0
    %2540 = vmatpush1.msra.mxu0 %v2167
    %2541 = vmatprep.subr.mxu0 0.0
    %2542 = vmatpush1.msra.mxu0 %v2166
    %2543 = vmatprep.subr.mxu0 0.0
    %2544 = vmatpush2.msra.mxu0 %v2197
    %2545 = vmatprep.subr.mxu0 0.0
    %2546 = vmatpush2.msra.mxu0 %v2196
    %2547 = vmatprep.subr.mxu0 0.0
    %2548 = vmatpush2.msra.mxu0 %v2195
    %2549 = vmatprep.subr.mxu0 0.0
    %2550 = vmatpush2.msra.mxu0 %v2194
    %2551 = vmatprep.subr.mxu0 0.0
    %2552 = vmatpush2.msra.mxu0 %v2193
    %2553 = vmatprep.subr.mxu0 0.0
    %2554 = vmatpush2.msra.mxu0 %v2192
    %2555 = vmatprep.subr.mxu0 0.0
    %2556 = vmatpush2.msra.mxu0 %v2191
    %2557 = vmatprep.subr.mxu0 0.0
    %2558 = vmatpush2.msra.mxu0 %v2190
    %2559 = vmatprep.subr.mxu0 0.0
    %2560 = vmatpush2.msra.mxu0 %v2189
    %2561 = vmatprep.subr.mxu0 0.0
    %2562 = vmatpush2.msra.mxu0 %v2188
    %2563 = vmatprep.subr.mxu0 0.0
    %2564 = vmatpush2.msra.mxu0 %v2187
    %2565 = vmatprep.subr.mxu0 0.0
    %2566 = vmatpush2.msra.mxu0 %v2186
    %2567 = vmatprep.subr.mxu0 0.0
    %2568 = vmatpush2.msra.mxu0 %v2185
    %2569 = vmatprep.subr.mxu0 0.0
    %2570 = vmatpush2.msra.mxu0 %v2184
    %2571 = vmatprep.subr.mxu0 0.0
    %2572 = vmatpush2.msra.mxu0 %v2183
    %2573 = vmatprep.subr.mxu0 0.0
    %2574 = vmatpush2.msra.mxu0 %v2182
    %2575 = vmatprep.mubr.f32.mxu0 %v2057
    %2576 = vmatmul.mubr.f32.gmra.mxu0 %v2056
    %v2577 = vpop.f32.mrf.mxu0
    %v2578 = vadd.f32 %v2508, %v2577
    %v2579 = vpop.f32.mrf.mxu0
    %2580 = vdwg.mxu0
    %2581 = vmatprep.subr.mxu0 0.0
    %2582 = vmatpush1.msra.mxu0 %v2213
    %2583 = vmatprep.subr.mxu0 0.0
    %2584 = vmatpush1.msra.mxu0 %v2212
    %2585 = vmatprep.subr.mxu0 0.0
    %2586 = vmatpush1.msra.mxu0 %v2211
    %2587 = vmatprep.subr.mxu0 0.0
    %2588 = vmatpush1.msra.mxu0 %v2210
    %2589 = vmatprep.subr.mxu0 0.0
    %2590 = vmatpush1.msra.mxu0 %v2209
    %2591 = vmatprep.subr.mxu0 0.0
    %2592 = vmatpush1.msra.mxu0 %v2208
    %2593 = vmatprep.subr.mxu0 0.0
    %2594 = vmatpush1.msra.mxu0 %v2207
    %2595 = vmatprep.subr.mxu0 0.0
    %2596 = vmatpush1.msra.mxu0 %v2206
    %2597 = vmatprep.subr.mxu0 0.0
    %2598 = vmatpush1.msra.mxu0 %v2205
    %2599 = vmatprep.subr.mxu0 0.0
    %2600 = vmatpush1.msra.mxu0 %v2204
    %2601 = vmatprep.subr.mxu0 0.0
    %2602 = vmatpush1.msra.mxu0 %v2203
    %2603 = vmatprep.subr.mxu0 0.0
    %2604 = vmatpush1.msra.mxu0 %v2202
    %2605 = vmatprep.subr.mxu0 0.0
    %2606 = vmatpush1.msra.mxu0 %v2201
    %2607 = vmatprep.subr.mxu0 0.0
    %2608 = vmatpush1.msra.mxu0 %v2200
    %2609 = vmatprep.subr.mxu0 0.0
    %2610 = vmatpush1.msra.mxu0 %v2199
    %2611 = vmatprep.subr.mxu0 0.0
    %2612 = vmatpush1.msra.mxu0 %v2198
    %2613 = vmatprep.subr.mxu0 0.0
    %2614 = vmatpush2.msra.mxu0 %v2229
    %2615 = vmatprep.subr.mxu0 0.0
    %2616 = vmatpush2.msra.mxu0 %v2228
    %2617 = vmatprep.subr.mxu0 0.0
    %2618 = vmatpush2.msra.mxu0 %v2227
    %2619 = vmatprep.subr.mxu0 0.0
    %2620 = vmatpush2.msra.mxu0 %v2226
    %2621 = vmatprep.subr.mxu0 0.0
    %2622 = vmatpush2.msra.mxu0 %v2225
    %2623 = vmatprep.subr.mxu0 0.0
    %2624 = vmatpush2.msra.mxu0 %v2224
    %2625 = vmatprep.subr.mxu0 0.0
    %2626 = vmatpush2.msra.mxu0 %v2223
    %2627 = vmatprep.subr.mxu0 0.0
    %2628 = vmatpush2.msra.mxu0 %v2222
    %2629 = vmatprep.subr.mxu0 0.0
    %2630 = vmatpush2.msra.mxu0 %v2221
    %2631 = vmatprep.subr.mxu0 0.0
    %2632 = vmatpush2.msra.mxu0 %v2220
    %2633 = vmatprep.subr.mxu0 0.0
    %2634 = vmatpush2.msra.mxu0 %v2219
    %2635 = vmatprep.subr.mxu0 0.0
    %2636 = vmatpush2.msra.mxu0 %v2218
    %2637 = vmatprep.subr.mxu0 0.0
    %2638 = vmatpush2.msra.mxu0 %v2217
    %2639 = vmatprep.subr.mxu0 0.0
    %2640 = vmatpush2.msra.mxu0 %v2216
    %2641 = vmatprep.subr.mxu0 0.0
    %2642 = vmatpush2.msra.mxu0 %v2215
    %2643 = vmatprep.subr.mxu0 0.0
    %2644 = vmatpush2.msra.mxu0 %v2214
    %2645 = vmatprep.mubr.f32.mxu0 %v2045
    %2646 = vmatmul.mubr.f32.gmra.mxu0 %v2044
    %v2647 = vpop.f32.mrf.mxu0
    %v2648 = vadd.f32 %v2578, %v2647
    %v2649 = vpop.f32.mrf.mxu0
    %2650 = vdwg.mxu0
    %2651 = vmatprep.subr.mxu0 0.0
    %2652 = vmatpush1.msra.mxu0 %v2245
    %2653 = vmatprep.subr.mxu0 0.0
    %2654 = vmatpush1.msra.mxu0 %v2244
    %2655 = vmatprep.subr.mxu0 0.0
    %2656 = vmatpush1.msra.mxu0 %v2243
    %2657 = vmatprep.subr.mxu0 0.0
    %2658 = vmatpush1.msra.mxu0 %v2242
    %2659 = vmatprep.subr.mxu0 0.0
    %2660 = vmatpush1.msra.mxu0 %v2241
    %2661 = vmatprep.subr.mxu0 0.0
    %2662 = vmatpush1.msra.mxu0 %v2240
    %2663 = vmatprep.subr.mxu0 0.0
    %2664 = vmatpush1.msra.mxu0 %v2239
    %2665 = vmatprep.subr.mxu0 0.0
    %2666 = vmatpush1.msra.mxu0 %v2238
    %2667 = vmatprep.subr.mxu0 0.0
    %2668 = vmatpush1.msra.mxu0 %v2237
    %2669 = vmatprep.subr.mxu0 0.0
    %2670 = vmatpush1.msra.mxu0 %v2236
    %2671 = vmatprep.subr.mxu0 0.0
    %2672 = vmatpush1.msra.mxu0 %v2235
    %2673 = vmatprep.subr.mxu0 0.0
    %2674 = vmatpush1.msra.mxu0 %v2234
    %2675 = vmatprep.subr.mxu0 0.0
    %2676 = vmatpush1.msra.mxu0 %v2233
    %2677 = vmatprep.subr.mxu0 0.0
    %2678 = vmatpush1.msra.mxu0 %v2232
    %2679 = vmatprep.subr.mxu0 0.0
    %2680 = vmatpush1.msra.mxu0 %v2231
    %2681 = vmatprep.subr.mxu0 0.0
    %2682 = vmatpush1.msra.mxu0 %v2230
    %2683 = vmatprep.subr.mxu0 0.0
    %2684 = vmatpush2.msra.mxu0 %v2261
    %2685 = vmatprep.subr.mxu0 0.0
    %2686 = vmatpush2.msra.mxu0 %v2260
    %2687 = vmatprep.subr.mxu0 0.0
    %2688 = vmatpush2.msra.mxu0 %v2259
    %2689 = vmatprep.subr.mxu0 0.0
    %2690 = vmatpush2.msra.mxu0 %v2258
    %2691 = vmatprep.subr.mxu0 0.0
    %2692 = vmatpush2.msra.mxu0 %v2257
    %2693 = vmatprep.subr.mxu0 0.0
    %2694 = vmatpush2.msra.mxu0 %v2256
    %2695 = vmatprep.subr.mxu0 0.0
    %2696 = vmatpush2.msra.mxu0 %v2255
    %2697 = vmatprep.subr.mxu0 0.0
    %2698 = vmatpush2.msra.mxu0 %v2254
    %2699 = vmatprep.subr.mxu0 0.0
    %2700 = vmatpush2.msra.mxu0 %v2253
    %2701 = vmatprep.subr.mxu0 0.0
    %2702 = vmatpush2.msra.mxu0 %v2252
    %2703 = vmatprep.subr.mxu0 0.0
    %2704 = vmatpush2.msra.mxu0 %v2251
    %2705 = vmatprep.subr.mxu0 0.0
    %2706 = vmatpush2.msra.mxu0 %v2250
    %2707 = vmatprep.subr.mxu0 0.0
    %2708 = vmatpush2.msra.mxu0 %v2249
    %2709 = vmatprep.subr.mxu0 0.0
    %2710 = vmatpush2.msra.mxu0 %v2248
    %2711 = vmatprep.subr.mxu0 0.0
    %2712 = vmatpush2.msra.mxu0 %v2247
    %2713 = vmatprep.subr.mxu0 0.0
    %2714 = vmatpush2.msra.mxu0 %v2246
    %2715 = vmatprep.mubr.f32.mxu0 %v2063
    %2716 = vmatmul.mubr.f32.gmra.mxu0 %v2062
    %v2717 = vpop.f32.mrf.mxu0
    %v2718 = vadd.f32 %v2648, %v2717
    %v2719 = vpop.f32.mrf.mxu0
    %2720 = vdwg.mxu0
    %2721 = vmatprep.subr.mxu0 0.0
    %2722 = vmatpush1.msra.mxu0 %v2277
    %2723 = vmatprep.subr.mxu0 0.0
    %2724 = vmatpush1.msra.mxu0 %v2276
    %2725 = vmatprep.subr.mxu0 0.0
    %2726 = vmatpush1.msra.mxu0 %v2275
    %2727 = vmatprep.subr.mxu0 0.0
    %2728 = vmatpush1.msra.mxu0 %v2274
    %2729 = vmatprep.subr.mxu0 0.0
    %2730 = vmatpush1.msra.mxu0 %v2273
    %2731 = vmatprep.subr.mxu0 0.0
    %2732 = vmatpush1.msra.mxu0 %v2272
    %2733 = vmatprep.subr.mxu0 0.0
    %2734 = vmatpush1.msra.mxu0 %v2271
    %2735 = vmatprep.subr.mxu0 0.0
    %2736 = vmatpush1.msra.mxu0 %v2270
    %2737 = vmatprep.subr.mxu0 0.0
    %2738 = vmatpush1.msra.mxu0 %v2269
    %2739 = vmatprep.subr.mxu0 0.0
    %2740 = vmatpush1.msra.mxu0 %v2268
    %2741 = vmatprep.subr.mxu0 0.0
    %2742 = vmatpush1.msra.mxu0 %v2267
    %2743 = vmatprep.subr.mxu0 0.0
    %2744 = vmatpush1.msra.mxu0 %v2266
    %2745 = vmatprep.subr.mxu0 0.0
    %2746 = vmatpush1.msra.mxu0 %v2265
    %2747 = vmatprep.subr.mxu0 0.0
    %2748 = vmatpush1.msra.mxu0 %v2264
    %2749 = vmatprep.subr.mxu0 0.0
    %2750 = vmatpush1.msra.mxu0 %v2263
    %2751 = vmatprep.subr.mxu0 0.0
    %2752 = vmatpush1.msra.mxu0 %v2262
    %2753 = vmatprep.subr.mxu0 0.0
    %2754 = vmatpush2.msra.mxu0 %v2293
    %2755 = vmatprep.subr.mxu0 0.0
    %2756 = vmatpush2.msra.mxu0 %v2292
    %2757 = vmatprep.subr.mxu0 0.0
    %2758 = vmatpush2.msra.mxu0 %v2291
    %2759 = vmatprep.subr.mxu0 0.0
    %2760 = vmatpush2.msra.mxu0 %v2290
    %2761 = vmatprep.subr.mxu0 0.0
    %2762 = vmatpush2.msra.mxu0 %v2289
    %2763 = vmatprep.subr.mxu0 0.0
    %2764 = vmatpush2.msra.mxu0 %v2288
    %2765 = vmatprep.subr.mxu0 0.0
    %2766 = vmatpush2.msra.mxu0 %v2287
    %2767 = vmatprep.subr.mxu0 0.0
    %2768 = vmatpush2.msra.mxu0 %v2286
    %2769 = vmatprep.subr.mxu0 0.0
    %2770 = vmatpush2.msra.mxu0 %v2285
    %2771 = vmatprep.subr.mxu0 0.0
    %2772 = vmatpush2.msra.mxu0 %v2284
    %2773 = vmatprep.subr.mxu0 0.0
    %2774 = vmatpush2.msra.mxu0 %v2283
    %2775 = vmatprep.subr.mxu0 0.0
    %2776 = vmatpush2.msra.mxu0 %v2282
    %2777 = vmatprep.subr.mxu0 0.0
    %2778 = vmatpush2.msra.mxu0 %v2281
    %2779 = vmatprep.subr.mxu0 0.0
    %2780 = vmatpush2.msra.mxu0 %v2280
    %2781 = vmatprep.subr.mxu0 0.0
    %2782 = vmatpush2.msra.mxu0 %v2279
    %2783 = vmatprep.subr.mxu0 0.0
    %2784 = vmatpush2.msra.mxu0 %v2278
    %2785 = vmatprep.mubr.f32.mxu0 %v2067
    %2786 = vmatmul.mubr.f32.gmra.mxu0 %v2066
    %v2787 = vpop.f32.mrf.mxu0
    %v2788 = vadd.f32 %v2718, %v2787
    %v2789 = vpop.f32.mrf.mxu0
    %2790 = vdwg.mxu0
    %v2791 = vmax.f32 %v2788, 0.0
    %v2792 = vld [vmem:[%s9] sm:$0xff]
    %v2793 = vld [vmem:[%s9 + $0x8] sm:$0xff]
    %v2794 = vld [vmem:[%s9 + $0x10] sm:$0xff]
    %v2795 = vld [vmem:[%s9 + $0x18] sm:$0xff]
    %v2796 = vld [vmem:[%s9 + $0x20] sm:$0xff]
    %v2797 = vld [vmem:[%s9 + $0x28] sm:$0xff]
    %v2798 = vld [vmem:[%s9 + $0x30] sm:$0xff]
    %v2799 = vld [vmem:[%s9 + $0x38] sm:$0xff]
    %v2800 = vld [vmem:[%s9 + $0x40] sm:$0xff]
    %v2801 = vld [vmem:[%s9 + $0x48] sm:$0xff]
    %v2802 = vld [vmem:[%s9 + $0x50] sm:$0xff]
    %v2803 = vld [vmem:[%s9 + $0x58] sm:$0xff]
    %v2804 = vld [vmem:[%s9 + $0x60] sm:$0xff]
    %v2805 = vld [vmem:[%s9 + $0x68] sm:$0xff]
    %v2806 = vld [vmem:[%s9 + $0x70] sm:$0xff]
    %v2807 = vld [vmem:[%s10] sm:$0x1]
    %v2809 = vlaneseq
    %v2810 = vshrl.u32 %v2809, 7
    %v2811 = vsub.s32 0, %v2810
    %v2812 = vrot.slane %v2807, %v2811
    %vm2814 = vcmask 982016
    %v2816 = vsel %vm2814, %v2791, 0
    %2818 = vmatprep.subr.mxu0 0.0
    %2819 = vmatpush1.msra.mxu0 0.0
    %2820 = vmatprep.subr.mxu0 0.0
    %2821 = vmatpush1.msra.mxu0 %v2806
    %2822 = vmatprep.subr.mxu0 0.0
    %2823 = vmatpush1.msra.mxu0 %v2805
    %2824 = vmatprep.subr.mxu0 0.0
    %2825 = vmatpush1.msra.mxu0 %v2804
    %2826 = vmatprep.subr.mxu0 0.0
    %2827 = vmatpush1.msra.mxu0 %v2803
    %2828 = vmatprep.subr.mxu0 0.0
    %2829 = vmatpush1.msra.mxu0 %v2802
    %2830 = vmatprep.subr.mxu0 0.0
    %2831 = vmatpush1.msra.mxu0 %v2801
    %2832 = vmatprep.subr.mxu0 0.0
    %2833 = vmatpush1.msra.mxu0 %v2800
    %2834 = vmatprep.subr.mxu0 0.0
    %2835 = vmatpush1.msra.mxu0 %v2799
    %2836 = vmatprep.subr.mxu0 0.0
    %2837 = vmatpush1.msra.mxu0 %v2798
    %2838 = vmatprep.subr.mxu0 0.0
    %2839 = vmatpush1.msra.mxu0 %v2797
    %2840 = vmatprep.subr.mxu0 0.0
    %2841 = vmatpush1.msra.mxu0 %v2796
    %2842 = vmatprep.subr.mxu0 0.0
    %2843 = vmatpush1.msra.mxu0 %v2795
    %2844 = vmatprep.subr.mxu0 0.0
    %2845 = vmatpush1.msra.mxu0 %v2794
    %2846 = vmatprep.subr.mxu0 0.0
    %2847 = vmatpush1.msra.mxu0 %v2793
    %2848 = vmatprep.subr.mxu0 0.0
    %2849 = vmatpush1.msra.mxu0 %v2792
    %2850 = vmatprep.subr.mxu0 0.0
    %2851 = vmatpush2.msra.mxu0 0.0
    %2852 = vmatprep.subr.mxu0 0.0
    %2853 = vmatpush2.msra.mxu0 0.0
    %2854 = vmatprep.subr.mxu0 0.0
    %2855 = vmatpush2.msra.mxu0 0.0
    %2856 = vmatprep.subr.mxu0 0.0
    %2857 = vmatpush2.msra.mxu0 0.0
    %2858 = vmatprep.subr.mxu0 0.0
    %2859 = vmatpush2.msra.mxu0 0.0
    %2860 = vmatprep.subr.mxu0 0.0
    %2861 = vmatpush2.msra.mxu0 0.0
    %2862 = vmatprep.subr.mxu0 0.0
    %2863 = vmatpush2.msra.mxu0 0.0
    %2864 = vmatprep.subr.mxu0 0.0
    %2865 = vmatpush2.msra.mxu0 0.0
    %2866 = vmatprep.subr.mxu0 0.0
    %2867 = vmatpush2.msra.mxu0 0.0
    %2868 = vmatprep.subr.mxu0 0.0
    %2869 = vmatpush2.msra.mxu0 0.0
    %2870 = vmatprep.subr.mxu0 0.0
    %2871 = vmatpush2.msra.mxu0 0.0
    %2872 = vmatprep.subr.mxu0 0.0
    %2873 = vmatpush2.msra.mxu0 0.0
    %2874 = vmatprep.subr.mxu0 0.0
    %2875 = vmatpush2.msra.mxu0 0.0
    %2876 = vmatprep.subr.mxu0 0.0
    %2877 = vmatpush2.msra.mxu0 0.0
    %2878 = vmatprep.subr.mxu0 0.0
    %2879 = vmatpush2.msra.mxu0 0.0
    %2880 = vmatprep.subr.mxu0 0.0
    %2881 = vmatpush2.msra.mxu0 0.0
    %2882 = vmatprep.mubr.f32.mxu0 0.0
    %2883 = vmatmul.mubr.f32.gmra.mxu0 %v2816
    %v2884 = vpop.f32.mrf.mxu0
    %v2885 = vadd.f32 %v2812, %v2884
    %v2886 = vpop.f32.mrf.mxu0
    %2887 = vdwg.mxu0
    %v2888 = vmax.f32 %v2885, 0.0
    %vm2889 = vcmask 74752
    %2890 = vst.msk [vmem:[#allocation2] sm:$0x3] %vm2889, %v2888
    // Predicated region
    $region46: #{simple_conv_forward.1} parent=1 // pred_check
      _
    $region47: #{simple_conv_forward.1} parent=1 // pred_check_branch
      %2892 = sbr.rel (0) target = $region49
    $region48: #{simple_conv_forward.1} parent=1 // pred_region
      %s2894 = ssub.s32 32, 32
      %2895 = vsyncadd [#allocation3], %s2894
      %s2897 = sshll.u32 [#allocation2], 4
      %s2898 = int_to_ptr.vmem [resolvable:$true] %s2897
      %2900 = dma.vmem_to_hbm [thread:$0]  %s2898, 32, %s11, [#allocation3]
    $region49: #{simple_conv_forward.1} parent=1 // pred_fallthru
      _
    // Predicated region
    $region50: #{simple_conv_forward.1} parent=1 // pred_check
      _
    $region51: #{simple_conv_forward.1} parent=1 // pred_check_branch
      %2902 = sbr.rel (0) target = $region53
    $region52: #{simple_conv_forward.1} parent=1 // pred_region
      %2903 = dma.done [#allocation3], 32
    $region53: #{simple_conv_forward.1} parent=1 // pred_fallthru
      _
    %2904 = vsyncpa [#allocation3], 1

</llo_original>
